<compile_context>
chip_gen: v5e
topology: v5e:2x2
jax: 0.10.0
libtpu: 0.0.40
codegen_flags: <defaults>
</compile_context>

<pallas_src>
import functools

import jax
import jax.numpy as jnp
from jax.experimental import pallas as pl
from jax.experimental.pallas import tpu as pltpu


# ----------------------------------------------------------------------------
# Build-time parameter restructuring (plain XLA, runs once).
# ----------------------------------------------------------------------------
def _band_weights(w_hwio, width):
    """HWIO (3,3,Cin,Cout) -> (3, W*Cin, W*Cout) block-banded matrices.

    Left-multiplying the band for tap kh by image row r+kh-1 (laid out as
    W*Cin lanes) yields that tap's contribution to the 3x3 "same" conv at
    every output width position (kw taps + width zero-padding are baked in).
    """
    cin, cout = w_hwio.shape[2], w_hwio.shape[3]
    kw = jnp.arange(3)[:, None, None]
    wi = jnp.arange(width)[None, :, None]
    wo = jnp.arange(width)[None, None, :]
    band = (wi == wo + kw - 1).astype(jnp.float32)           # (3, W, W)
    wm = jnp.einsum('kiw,hkco->hicwo', band, w_hwio)         # (3,W,Cin,W,Cout)
    return wm.reshape(3, width * cin, width * cout)


def _even_block_selector(width_in, c):
    """((width_in-1)*c, (width_in//2)*c) 0/1 matrix picking even lane blocks.

    After the lane pair-max, block 2j of the (width_in-1)*c wide activation
    holds pooled width position j; this selector is folded into the NEXT
    layer's banded weights, so the selection costs zero MXU ops at runtime.
    """
    m = jnp.zeros((width_in - 1, width_in // 2), jnp.float32)
    m = m.at[2 * jnp.arange(width_in // 2), jnp.arange(width_in // 2)].set(1.0)
    return jnp.kron(m, jnp.eye(c, dtype=jnp.float32))


def _rowpool_frame_selector(n_img, stride_in, k_rows, h_out):
    """0/1 matrix: even-row select + per-image compaction + halo framing.

    Input rows (K = k_rows) are the row pair-maxed activations where image b
    starts at row b*stride_in; output rows are n_img frames of (h_out + 2)
    rows whose first/last rows stay exactly zero (the height "same" padding
    of the next conv).
    """
    f_out = h_out + 2
    rows = (jnp.arange(n_img)[:, None] * f_out + 1
            + jnp.arange(h_out)[None, :]).ravel()
    cols = (jnp.arange(n_img)[:, None] * stride_in
            + 2 * jnp.arange(h_out)[None, :]).ravel()
    sel = jnp.zeros((n_img * f_out, k_rows), jnp.float32)
    return sel.at[rows, cols].set(1.0)


def _const_index(ndim, i):
    return (0,) * ndim


# ----------------------------------------------------------------------------
# Fused forward builder: precompute operands once, return a jitted forward().
# ----------------------------------------------------------------------------
def build_forward(params, *, batch, height, width, compute_dtype=jnp.bfloat16):
    n, h, w = batch, height, width
    assert h % 8 == 0 and w % 8 == 0, (
        'spatial dims must survive three 2x2 pools with even sizes')
    # TODO(synk): odd spatial dims (where MaxPool2d silently truncates the
    # last row/col) are not supported by this fused formulation.

    cin = params['w1'].shape[2]
    c1 = params['w1'].shape[3]
    c2 = params['w2'].shape[3]
    c3 = params['w3'].shape[3]
    num_classes = params['w_fc'].shape[1]
    cdt = compute_dtype

    w2_, w3_ = w // 2, w // 4
    h2, h3 = h // 2, h // 4
    hp2, hp3 = h2 + 2, h3 + 2
    t2, t3 = n * hp2, n * hp3
    ncp = ((num_classes + 127) // 128) * 128           # lane-dense fc output

    # Pad Cin so the first-layer lane width is 128-aligned (3 -> 8 at W=16).
    cin_p = cin
    if (w * cin) % 128:
        for c in range(cin + 1, cin + 17):
            if (w * c) % 128 == 0:
                cin_p = c
                break
    w1p = jnp.pad(params['w1'], ((0, 0), (0, 0), (0, cin_p - cin), (0, 0)))

    # conv1: the three kh taps are lane-stacked in the input, so the banded
    # weights stack along K and the conv is ONE matmul (K = 3*W*Cin_pad).
    w1f = _band_weights(w1p, w).reshape(3 * w * cin_p, w * c1)

    # conv2/conv3: banded weights with the previous layer's even-lane-block
    # pool selection folded in (K = (W_prev - 1) * C_prev).
    s1 = _even_block_selector(w, c1)
    s2 = _even_block_selector(w2_, c2)
    w2f = jnp.einsum('ij,hjk->hik', s1, _band_weights(params['w2'], w2_))
    w3f = jnp.einsum('ij,hjk->hik', s2, _band_weights(params['w3'], w3_))

    # Row-pool + frame selectors (one tiny 0/1 matmul per pooled layer).
    r1 = _rowpool_frame_selector(n, h, n * h - 1, h2)       # (t2, n*h-1)
    r2 = _rowpool_frame_selector(n, hp2, t2 - 3, h3)        # (t3, t2-3)

    # Global-pool row gather (picks row b*hp3 of the shift-maxed activations).
    rg = jnp.zeros((n, t3 - h3 - 1), jnp.float32)
    rg = rg.at[jnp.arange(n), jnp.arange(n) * hp3].set(1.0)

    # fc head, lane-padded to a multiple of 128 (unmasked output stores).
    wfc_p = jnp.pad(params['w_fc'], ((0, 0), (0, ncp - num_classes)))
    bfc_p = jnp.pad(params['b_fc'], (0, ncp - num_classes))[None, :]

    args = [
        w1f.astype(cdt), jnp.tile(params['b1'], w)[None, :],
        r1.astype(cdt),
        w2f.astype(cdt), jnp.tile(params['b2'], w2_)[None, :],
        r2.astype(cdt),
        w3f.astype(cdt), jnp.tile(params['b3'], w3_)[None, :],
        rg.astype(cdt),
        wfc_p.astype(cdt), bfc_p,
    ]

    def kernel(x_ref, w1_ref, b1_ref, r1_ref, w2_ref, b2_ref, r2_ref,
               w3_ref, b3_ref, rg_ref, wfc_ref, bfc_ref, o_ref):
        f32 = jnp.float32
        # ---- conv1 + bias + ReLU: one MXU matmul, K = 3*W*Cin_pad ---------
        a1 = jnp.dot(x_ref[...], w1_ref[...], preferred_element_type=f32)
        z1 = jnp.maximum(a1 + b1_ref[...], 0.0).astype(cdt)    # (N*H, W*C1)

        # ---- 2x2 max pool #1: VPU pair-maxes + one 0/1 framing matmul ----
        zl = jnp.maximum(z1[:, :(w - 1) * c1], z1[:, c1:])
        zr = jnp.maximum(zl[0:n * h - 1, :], zl[1:n * h, :])
        y1 = jnp.dot(r1_ref[...], zr, preferred_element_type=f32)
        # y1: (T2, (W-1)*C1); halo rows are exactly zero; even lane blocks
        # hold the pooled activations (selection folded into w2f).

        # ---- conv2: 3 row-shifted matmuls against banded weights ----------
        a2 = jnp.dot(y1[0:t2 - 2].astype(cdt), w2_ref[0],
                     preferred_element_type=f32)
        a2 += jnp.dot(y1[1:t2 - 1].astype(cdt), w2_ref[1],
                      preferred_element_type=f32)
        a2 += jnp.dot(y1[2:t2].astype(cdt), w2_ref[2],
                      preferred_element_type=f32)
        z2 = jnp.maximum(a2 + b2_ref[...], 0.0).astype(cdt)    # (T2-2, W2*C2)

        # ---- 2x2 max pool #2 ----------------------------------------------
        zl = jnp.maximum(z2[:, :(w2_ - 1) * c2], z2[:, c2:])
        zr = jnp.maximum(zl[0:t2 - 3, :], zl[1:t2 - 2, :])
        y2 = jnp.dot(r2_ref[...], zr, preferred_element_type=f32)

        # ---- conv3 ----------------------------------------------------------
        a3 = jnp.dot(y2[0:t3 - 2].astype(cdt), w3_ref[0],
                     preferred_element_type=f32)
        a3 += jnp.dot(y2[1:t3 - 1].astype(cdt), w3_ref[1],
                      preferred_element_type=f32)
        a3 += jnp.dot(y2[2:t3].astype(cdt), w3_ref[2],
                      preferred_element_type=f32)
        z3 = jnp.maximum(a3 + b3_ref[...], 0.0)                 # (T3-2, W3*C3)

        # ---- pool#3 + AdaptiveMaxPool2d((1,1)) fused into one global max --
        # (exact for even spatial dims: the 2x2 max pool is subsumed by the
        #  global max, so layer 3 needs no pooling at all).
        m = z3
        for _ in range(h3 - 1):                 # running max over h3 rows
            m = jnp.maximum(m[:-1, :], m[1:, :])
        for _ in range(w3_ - 1):                # running max over W3 blocks
            m = jnp.maximum(m[:, :-c3], m[:, c3:])
        # m[b*hp3, :] is image b's global max over its h3 x W3 valid window.
        g = jnp.dot(rg_ref[...], m.astype(cdt),
                    preferred_element_type=f32)                 # (N, C3)

        # ---- fc head (output lanes padded to 128) ---------------------------
        out = jnp.dot(g.astype(cdt), wfc_ref[...],
                      preferred_element_type=f32)
        o_ref[...] = out + bfc_ref[...]

    x_rows, x_lanes = n * h, 3 * w * cin_p
    grid_spec = pltpu.PrefetchScalarGridSpec(
        num_scalar_prefetch=0,
        grid=(1,),                                  # whole batch in one step
        in_specs=[pl.BlockSpec((x_rows, x_lanes),
                               functools.partial(_const_index, 2))] + [
            pl.BlockSpec(a.shape, functools.partial(_const_index, a.ndim))
            for a in args
        ],
        out_specs=pl.BlockSpec((n, ncp), functools.partial(_const_index, 2)),
    )

    fused = pl.pallas_call(
        kernel,
        out_shape=jax.ShapeDtypeStruct((n, ncp), jnp.float32),
        grid_spec=grid_spec,
        compiler_params=pltpu.CompilerParams(
            dimension_semantics=('arbitrary',),
            vmem_limit_bytes=32 * 1024 * 1024),     # explicit VMEM budget
    )

    def forward(x_nchw):
        assert x_nchw.shape == (n, cin, h, w), x_nchw.shape
        # NCHW -> lane-dense NHWC with zero-padded channels.
        xt = jnp.transpose(x_nchw, (0, 2, 3, 1))
        if cin_p > cin:
            xt = jnp.pad(xt, ((0, 0), (0, 0), (0, 0), (0, cin_p - cin)))
        x_ld = xt.reshape(n, h, w * cin_p)
        # Lane-stack the three kh taps (rows r-1 / r / r+1, zero at the image
        # borders): conv1 becomes one matmul and the halos ride the input DMA.
        zrow = jnp.zeros((n, 1, w * cin_p), x_ld.dtype)
        x_up = jnp.concatenate([zrow, x_ld[:, :h - 1, :]], axis=1)
        x_dn = jnp.concatenate([x_ld[:, 1:, :], zrow], axis=1)
        x_stk = jnp.concatenate([x_up, x_ld, x_dn], axis=2)
        x_stk = x_stk.reshape(n * h, 3 * w * cin_p).astype(cdt)
        out = fused(x_stk, *args)
        return out[:, :num_classes]

    return jax.jit(forward)


# ----------------------------------------------------------------------------
# Parameters + pure-JAX reference (mirrors the PyTorch forward).
# ----------------------------------------------------------------------------
def init_params(key, input_channels=3, output_channels=64, num_classes=10):
    ks = jax.random.split(key, 8)

    def uconv(k, cin, cout):
        bound = 1.0 / jnp.sqrt(cin * 9.0)
        return jax.random.uniform(k, (3, 3, cin, cout), jnp.float32,
                                  -bound, bound)

    def ubias(k, fan_in, nn_):
        bound = 1.0 / jnp.sqrt(float(fan_in))
        return jax.random.uniform(k, (nn_,), jnp.float32, -bound, bound)

    fcb = 1.0 / jnp.sqrt(float(output_channels))
    return {
        "w1": uconv(ks[0], input_channels, 16),
        "b1": ubias(ks[1], input_channels * 9, 16),
        "w2": uconv(ks[2], 16, 32),
        "b2": ubias(ks[3], 16 * 9, 32),
        "w3": uconv(ks[4], 32, output_channels),
        "b3": ubias(ks[5], 32 * 9, output_channels),
        "w_fc": jax.random.uniform(ks[6], (output_channels, num_classes),
                                   jnp.float32, -fcb, fcb),
        "b_fc": ubias(ks[7], output_channels, num_classes),
    }


def ref_forward(x_nchw, p):
    def conv(x, w_hwio, b):
        w_oihw = jnp.transpose(w_hwio, (3, 2, 0, 1))
        y = jax.lax.conv_general_dilated(
            x, w_oihw, (1, 1), ((1, 1), (1, 1)),
            dimension_numbers=("NCHW", "OIHW", "NCHW"))
        return y + b[None, :, None, None]

    def pool(x):
        return jax.lax.reduce_window(x, -jnp.inf, jax.lax.max,
                                     (1, 1, 2, 2), (1, 1, 2, 2), "VALID")

    x = pool(jax.nn.relu(conv(x_nchw, p["w1"], p["b1"])))
    x = pool(jax.nn.relu(conv(x, p["w2"], p["b2"])))
    x = pool(jax.nn.relu(conv(x, p["w3"], p["b3"])))
    g = jnp.max(x, axis=(2, 3))                    # AdaptiveMaxPool2d((1,1))
    return g @ p["w_fc"] + p["b_fc"]


if __name__ == "__main__":
    key = jax.random.PRNGKey(0)
    k_x, k_p = jax.random.split(key)

    # PyTorch NCHW convention: batch=2, channels=3, spatial=16x16.
    x = jax.random.normal(k_x, (2, 3, 16, 16), jnp.float32)
    params = init_params(k_p)
    ref = jax.block_until_ready(ref_forward(x, params))

    # f32-operand path: matches the XLA convolution reference tightly.
    fwd_f32 = build_forward(params, batch=2, height=16, width=16,
                            compute_dtype=jnp.float32)
    out_f32 = jax.block_until_ready(fwd_f32(x))
    assert out_f32.shape == (2, 10), out_f32.shape
    assert jnp.allclose(out_f32, ref, rtol=1e-3, atol=1e-3), (
        f"f32 max abs diff = {jnp.max(jnp.abs(out_f32 - ref))}")

    # bf16-operand path (native MXU rate on v6e/v7x).  bf16 mantissa gives
    # ~1% relative error through three conv layers, so the bound is loose.
    fwd_bf16 = build_forward(params, batch=2, height=16, width=16,
                             compute_dtype=jnp.bfloat16)
    out_bf16 = jax.block_until_ready(fwd_bf16(x))
    assert out_bf16.shape == (2, 10), out_bf16.shape
    assert jnp.allclose(out_bf16, ref, rtol=1e-1, atol=1e-1), (
        f"bf16 max abs diff = {jnp.max(jnp.abs(out_bf16 - ref))}")

    print("KERNEL_OK")
</pallas_src>

<mosaic_0001>
module attributes {stable_mosaic.version = 11 : i64} {
  func.func @kernel(%arg0: i32, %arg1: memref<32x384xf32, #tpu.memory_space<vmem>>, %arg2: memref<384x256xf32, #tpu.memory_space<vmem>>, %arg3: memref<1x256xf32, #tpu.memory_space<vmem>>, %arg4: memref<20x31xf32, #tpu.memory_space<vmem>>, %arg5: memref<3x240x256xf32, #tpu.memory_space<vmem>>, %arg6: memref<1x256xf32, #tpu.memory_space<vmem>>, %arg7: memref<12x17xf32, #tpu.memory_space<vmem>>, %arg8: memref<3x224x256xf32, #tpu.memory_space<vmem>>, %arg9: memref<1x256xf32, #tpu.memory_space<vmem>>, %arg10: memref<2x7xf32, #tpu.memory_space<vmem>>, %arg11: memref<64x128xf32, #tpu.memory_space<vmem>>, %arg12: memref<1x128xf32, #tpu.memory_space<vmem>>, %arg13: memref<2x128xf32, #tpu.memory_space<vmem>>) attributes {dimension_semantics = [#tpu.dimension_semantics<arbitrary>], iteration_bounds = array<i64: 1>, scalar_prefetch = 0 : i64, scratch_operands = 0 : i64, tpu.core_type = #tpu.core_type<tc>, window_params = [{pipeline_mode = #tpu.pipeline_mode<synchronous>, transform_indices = @transform_0, window_bounds = array<i64: 32, 384>}, {pipeline_mode = #tpu.pipeline_mode<synchronous>, transform_indices = @transform_1, window_bounds = array<i64: 384, 256>}, {pipeline_mode = #tpu.pipeline_mode<synchronous>, transform_indices = @transform_2, window_bounds = array<i64: 1, 256>}, {pipeline_mode = #tpu.pipeline_mode<synchronous>, transform_indices = @transform_3, window_bounds = array<i64: 20, 31>}, {pipeline_mode = #tpu.pipeline_mode<synchronous>, transform_indices = @transform_4, window_bounds = array<i64: 3, 240, 256>}, {pipeline_mode = #tpu.pipeline_mode<synchronous>, transform_indices = @transform_5, window_bounds = array<i64: 1, 256>}, {pipeline_mode = #tpu.pipeline_mode<synchronous>, transform_indices = @transform_6, window_bounds = array<i64: 12, 17>}, {pipeline_mode = #tpu.pipeline_mode<synchronous>, transform_indices = @transform_7, window_bounds = array<i64: 3, 224, 256>}, {pipeline_mode = #tpu.pipeline_mode<synchronous>, transform_indices = @transform_8, window_bounds = array<i64: 1, 256>}, {pipeline_mode = #tpu.pipeline_mode<synchronous>, transform_indices = @transform_9, window_bounds = array<i64: 2, 7>}, {pipeline_mode = #tpu.pipeline_mode<synchronous>, transform_indices = @transform_10, window_bounds = array<i64: 64, 128>}, {pipeline_mode = #tpu.pipeline_mode<synchronous>, transform_indices = @transform_11, window_bounds = array<i64: 1, 128>}, {pipeline_mode = #tpu.pipeline_mode<synchronous>, transform_indices = @transform_12, window_bounds = array<i64: 2, 128>}]} {
    %c0 = arith.constant 0 : index
    %c0_0 = arith.constant 0 : index
    %0 = vector.load %arg1[%c0, %c0_0] : memref<32x384xf32, #tpu.memory_space<vmem>>, vector<32x384xf32>
    %c0_1 = arith.constant 0 : index
    %c0_2 = arith.constant 0 : index
    %1 = vector.load %arg2[%c0_1, %c0_2] : memref<384x256xf32, #tpu.memory_space<vmem>>, vector<384x256xf32>
    %cst = arith.constant dense<0.000000e+00> : vector<32x256xf32>
    %2 = tpu.matmul %0, %1, %cst {dimension_numbers = #tpu.dot_dimension_numbers<[1], [0], [0], [1], [0, 0, 1, 1], [], []>} : vector<32x384xf32>, vector<384x256xf32>, vector<32x256xf32> -> vector<32x256xf32>
    %c0_3 = arith.constant 0 : index
    %c0_4 = arith.constant 0 : index
    %3 = vector.load %arg3[%c0_3, %c0_4] : memref<1x256xf32, #tpu.memory_space<vmem>>, vector<1x256xf32>
    %4 = vector.broadcast %3 : vector<1x256xf32> to vector<32x256xf32>
    %5 = arith.addf %2, %4 : vector<32x256xf32>
    %cst_5 = arith.constant 0.000000e+00 : f32
    %6 = vector.broadcast %cst_5 : f32 to vector<32x256xf32>
    %7 = arith.maximumf %5, %6 : vector<32x256xf32>
    %8 = vector.extract_strided_slice %7 {offsets = [0, 0], sizes = [32, 240], strides = [1, 1]} : vector<32x256xf32> to vector<32x240xf32>
    %9 = vector.extract_strided_slice %7 {offsets = [0, 16], sizes = [32, 240], strides = [1, 1]} : vector<32x256xf32> to vector<32x240xf32>
    %10 = arith.maximumf %8, %9 : vector<32x240xf32>
    %11 = vector.extract_strided_slice %10 {offsets = [0, 0], sizes = [31, 240], strides = [1, 1]} : vector<32x240xf32> to vector<31x240xf32>
    %12 = vector.extract_strided_slice %10 {offsets = [1, 0], sizes = [31, 240], strides = [1, 1]} : vector<32x240xf32> to vector<31x240xf32>
    %13 = arith.maximumf %11, %12 : vector<31x240xf32>
    %c0_6 = arith.constant 0 : index
    %c0_7 = arith.constant 0 : index
    %14 = vector.load %arg4[%c0_6, %c0_7] : memref<20x31xf32, #tpu.memory_space<vmem>>, vector<20x31xf32>
    %cst_8 = arith.constant dense<0.000000e+00> : vector<20x240xf32>
    %15 = tpu.matmul %14, %13, %cst_8 {dimension_numbers = #tpu.dot_dimension_numbers<[1], [0], [0], [1], [0, 0, 1, 1], [], []>} : vector<20x31xf32>, vector<31x240xf32>, vector<20x240xf32> -> vector<20x240xf32>
    %16 = vector.extract_strided_slice %15 {offsets = [0, 0], sizes = [18, 240], strides = [1, 1]} : vector<20x240xf32> to vector<18x240xf32>
    %c0_9 = arith.constant 0 : index
    %c0_10 = arith.constant 0 : index
    %c0_11 = arith.constant 0 : index
    %17 = vector.load %arg5[%c0_9, %c0_10, %c0_11] : memref<3x240x256xf32, #tpu.memory_space<vmem>>, vector<1x240x256xf32>
    %18 = vector.shape_cast %17 : vector<1x240x256xf32> to vector<240x256xf32>
    %cst_12 = arith.constant dense<0.000000e+00> : vector<18x256xf32>
    %19 = tpu.matmul %16, %18, %cst_12 {dimension_numbers = #tpu.dot_dimension_numbers<[1], [0], [0], [1], [0, 0, 1, 1], [], []>} : vector<18x240xf32>, vector<240x256xf32>, vector<18x256xf32> -> vector<18x256xf32>
    %20 = vector.extract_strided_slice %15 {offsets = [1, 0], sizes = [18, 240], strides = [1, 1]} : vector<20x240xf32> to vector<18x240xf32>
    %c1 = arith.constant 1 : index
    %c0_13 = arith.constant 0 : index
    %c0_14 = arith.constant 0 : index
    %21 = vector.load %arg5[%c1, %c0_13, %c0_14] : memref<3x240x256xf32, #tpu.memory_space<vmem>>, vector<1x240x256xf32>
    %22 = vector.shape_cast %21 : vector<1x240x256xf32> to vector<240x256xf32>
    %cst_15 = arith.constant dense<0.000000e+00> : vector<18x256xf32>
    %23 = tpu.matmul %20, %22, %cst_15 {dimension_numbers = #tpu.dot_dimension_numbers<[1], [0], [0], [1], [0, 0, 1, 1], [], []>} : vector<18x240xf32>, vector<240x256xf32>, vector<18x256xf32> -> vector<18x256xf32>
    %24 = arith.addf %19, %23 : vector<18x256xf32>
    %25 = vector.extract_strided_slice %15 {offsets = [2, 0], sizes = [18, 240], strides = [1, 1]} : vector<20x240xf32> to vector<18x240xf32>
    %c2 = arith.constant 2 : index
    %c0_16 = arith.constant 0 : index
    %c0_17 = arith.constant 0 : index
    %26 = vector.load %arg5[%c2, %c0_16, %c0_17] : memref<3x240x256xf32, #tpu.memory_space<vmem>>, vector<1x240x256xf32>
    %27 = vector.shape_cast %26 : vector<1x240x256xf32> to vector<240x256xf32>
    %cst_18 = arith.constant dense<0.000000e+00> : vector<18x256xf32>
    %28 = tpu.matmul %25, %27, %cst_18 {dimension_numbers = #tpu.dot_dimension_numbers<[1], [0], [0], [1], [0, 0, 1, 1], [], []>} : vector<18x240xf32>, vector<240x256xf32>, vector<18x256xf32> -> vector<18x256xf32>
    %29 = arith.addf %24, %28 : vector<18x256xf32>
    %c0_19 = arith.constant 0 : index
    %c0_20 = arith.constant 0 : index
    %30 = vector.load %arg6[%c0_19, %c0_20] : memref<1x256xf32, #tpu.memory_space<vmem>>, vector<1x256xf32>
    %31 = vector.broadcast %30 : vector<1x256xf32> to vector<18x256xf32>
    %32 = arith.addf %29, %31 : vector<18x256xf32>
    %cst_21 = arith.constant 0.000000e+00 : f32
    %33 = vector.broadcast %cst_21 : f32 to vector<18x256xf32>
    %34 = arith.maximumf %32, %33 : vector<18x256xf32>
    %35 = vector.extract_strided_slice %34 {offsets = [0, 0], sizes = [18, 224], strides = [1, 1]} : vector<18x256xf32> to vector<18x224xf32>
    %36 = vector.extract_strided_slice %34 {offsets = [0, 32], sizes = [18, 224], strides = [1, 1]} : vector<18x256xf32> to vector<18x224xf32>
    %37 = arith.maximumf %35, %36 : vector<18x224xf32>
    %38 = vector.extract_strided_slice %37 {offsets = [0, 0], sizes = [17, 224], strides = [1, 1]} : vector<18x224xf32> to vector<17x224xf32>
    %39 = vector.extract_strided_slice %37 {offsets = [1, 0], sizes = [17, 224], strides = [1, 1]} : vector<18x224xf32> to vector<17x224xf32>
    %40 = arith.maximumf %38, %39 : vector<17x224xf32>
    %c0_22 = arith.constant 0 : index
    %c0_23 = arith.constant 0 : index
    %41 = vector.load %arg7[%c0_22, %c0_23] : memref<12x17xf32, #tpu.memory_space<vmem>>, vector<12x17xf32>
    %cst_24 = arith.constant dense<0.000000e+00> : vector<12x224xf32>
    %42 = tpu.matmul %41, %40, %cst_24 {dimension_numbers = #tpu.dot_dimension_numbers<[1], [0], [0], [1], [0, 0, 1, 1], [], []>} : vector<12x17xf32>, vector<17x224xf32>, vector<12x224xf32> -> vector<12x224xf32>
    %43 = vector.extract_strided_slice %42 {offsets = [0, 0], sizes = [10, 224], strides = [1, 1]} : vector<12x224xf32> to vector<10x224xf32>
    %c0_25 = arith.constant 0 : index
    %c0_26 = arith.constant 0 : index
    %c0_27 = arith.constant 0 : index
    %44 = vector.load %arg8[%c0_25, %c0_26, %c0_27] : memref<3x224x256xf32, #tpu.memory_space<vmem>>, vector<1x224x256xf32>
    %45 = vector.shape_cast %44 : vector<1x224x256xf32> to vector<224x256xf32>
    %cst_28 = arith.constant dense<0.000000e+00> : vector<10x256xf32>
    %46 = tpu.matmul %43, %45, %cst_28 {dimension_numbers = #tpu.dot_dimension_numbers<[1], [0], [0], [1], [0, 0, 1, 1], [], []>} : vector<10x224xf32>, vector<224x256xf32>, vector<10x256xf32> -> vector<10x256xf32>
    %47 = vector.extract_strided_slice %42 {offsets = [1, 0], sizes = [10, 224], strides = [1, 1]} : vector<12x224xf32> to vector<10x224xf32>
    %c1_29 = arith.constant 1 : index
    %c0_30 = arith.constant 0 : index
    %c0_31 = arith.constant 0 : index
    %48 = vector.load %arg8[%c1_29, %c0_30, %c0_31] : memref<3x224x256xf32, #tpu.memory_space<vmem>>, vector<1x224x256xf32>
    %49 = vector.shape_cast %48 : vector<1x224x256xf32> to vector<224x256xf32>
    %cst_32 = arith.constant dense<0.000000e+00> : vector<10x256xf32>
    %50 = tpu.matmul %47, %49, %cst_32 {dimension_numbers = #tpu.dot_dimension_numbers<[1], [0], [0], [1], [0, 0, 1, 1], [], []>} : vector<10x224xf32>, vector<224x256xf32>, vector<10x256xf32> -> vector<10x256xf32>
    %51 = arith.addf %46, %50 : vector<10x256xf32>
    %52 = vector.extract_strided_slice %42 {offsets = [2, 0], sizes = [10, 224], strides = [1, 1]} : vector<12x224xf32> to vector<10x224xf32>
    %c2_33 = arith.constant 2 : index
    %c0_34 = arith.constant 0 : index
    %c0_35 = arith.constant 0 : index
    %53 = vector.load %arg8[%c2_33, %c0_34, %c0_35] : memref<3x224x256xf32, #tpu.memory_space<vmem>>, vector<1x224x256xf32>
    %54 = vector.shape_cast %53 : vector<1x224x256xf32> to vector<224x256xf32>
    %cst_36 = arith.constant dense<0.000000e+00> : vector<10x256xf32>
    %55 = tpu.matmul %52, %54, %cst_36 {dimension_numbers = #tpu.dot_dimension_numbers<[1], [0], [0], [1], [0, 0, 1, 1], [], []>} : vector<10x224xf32>, vector<224x256xf32>, vector<10x256xf32> -> vector<10x256xf32>
    %56 = arith.addf %51, %55 : vector<10x256xf32>
    %c0_37 = arith.constant 0 : index
    %c0_38 = arith.constant 0 : index
    %57 = vector.load %arg9[%c0_37, %c0_38] : memref<1x256xf32, #tpu.memory_space<vmem>>, vector<1x256xf32>
    %58 = vector.broadcast %57 : vector<1x256xf32> to vector<10x256xf32>
    %59 = arith.addf %56, %58 : vector<10x256xf32>
    %cst_39 = arith.constant 0.000000e+00 : f32
    %60 = vector.broadcast %cst_39 : f32 to vector<10x256xf32>
    %61 = arith.maximumf %59, %60 : vector<10x256xf32>
    %62 = vector.extract_strided_slice %61 {offsets = [0, 0], sizes = [9, 256], strides = [1, 1]} : vector<10x256xf32> to vector<9x256xf32>
    %63 = vector.extract_strided_slice %61 {offsets = [1, 0], sizes = [9, 256], strides = [1, 1]} : vector<10x256xf32> to vector<9x256xf32>
    %64 = arith.maximumf %62, %63 : vector<9x256xf32>
    %65 = vector.extract_strided_slice %64 {offsets = [0, 0], sizes = [8, 256], strides = [1, 1]} : vector<9x256xf32> to vector<8x256xf32>
    %66 = vector.extract_strided_slice %64 {offsets = [1, 0], sizes = [8, 256], strides = [1, 1]} : vector<9x256xf32> to vector<8x256xf32>
    %67 = arith.maximumf %65, %66 : vector<8x256xf32>
    %68 = vector.extract_strided_slice %67 {offsets = [0, 0], sizes = [7, 256], strides = [1, 1]} : vector<8x256xf32> to vector<7x256xf32>
    %69 = vector.extract_strided_slice %67 {offsets = [1, 0], sizes = [7, 256], strides = [1, 1]} : vector<8x256xf32> to vector<7x256xf32>
    %70 = arith.maximumf %68, %69 : vector<7x256xf32>
    %71 = vector.extract_strided_slice %70 {offsets = [0, 0], sizes = [7, 192], strides = [1, 1]} : vector<7x256xf32> to vector<7x192xf32>
    %72 = vector.extract_strided_slice %70 {offsets = [0, 64], sizes = [7, 192], strides = [1, 1]} : vector<7x256xf32> to vector<7x192xf32>
    %73 = arith.maximumf %71, %72 : vector<7x192xf32>
    %74 = vector.extract_strided_slice %73 {offsets = [0, 0], sizes = [7, 128], strides = [1, 1]} : vector<7x192xf32> to vector<7x128xf32>
    %75 = vector.extract_strided_slice %73 {offsets = [0, 64], sizes = [7, 128], strides = [1, 1]} : vector<7x192xf32> to vector<7x128xf32>
    %76 = arith.maximumf %74, %75 : vector<7x128xf32>
    %77 = vector.extract_strided_slice %76 {offsets = [0, 0], sizes = [7, 64], strides = [1, 1]} : vector<7x128xf32> to vector<7x64xf32>
    %78 = vector.extract_strided_slice %76 {offsets = [0, 64], sizes = [7, 64], strides = [1, 1]} : vector<7x128xf32> to vector<7x64xf32>
    %79 = arith.maximumf %77, %78 : vector<7x64xf32>
    %c0_40 = arith.constant 0 : index
    %c0_41 = arith.constant 0 : index
    %80 = vector.load %arg10[%c0_40, %c0_41] : memref<2x7xf32, #tpu.memory_space<vmem>>, vector<2x7xf32>
    %cst_42 = arith.constant dense<0.000000e+00> : vector<2x64xf32>
    %81 = tpu.matmul %80, %79, %cst_42 {dimension_numbers = #tpu.dot_dimension_numbers<[1], [0], [0], [1], [0, 0, 1, 1], [], []>} : vector<2x7xf32>, vector<7x64xf32>, vector<2x64xf32> -> vector<2x64xf32>
    %c0_43 = arith.constant 0 : index
    %c0_44 = arith.constant 0 : index
    %82 = vector.load %arg11[%c0_43, %c0_44] : memref<64x128xf32, #tpu.memory_space<vmem>>, vector<64x128xf32>
    %cst_45 = arith.constant dense<0.000000e+00> : vector<2x128xf32>
    %83 = tpu.matmul %81, %82, %cst_45 {dimension_numbers = #tpu.dot_dimension_numbers<[1], [0], [0], [1], [0, 0, 1, 1], [], []>} : vector<2x64xf32>, vector<64x128xf32>, vector<2x128xf32> -> vector<2x128xf32>
    %c0_46 = arith.constant 0 : index
    %c0_47 = arith.constant 0 : index
    %84 = vector.load %arg12[%c0_46, %c0_47] : memref<1x128xf32, #tpu.memory_space<vmem>>, vector<1x128xf32>
    %85 = vector.broadcast %84 : vector<1x128xf32> to vector<2x128xf32>
    %86 = arith.addf %83, %85 : vector<2x128xf32>
    %c0_48 = arith.constant 0 : index
    %c0_49 = arith.constant 0 : index
    %87 = vector.load %arg13[%c0_48, %c0_49] : memref<2x128xf32, #tpu.memory_space<vmem>>, vector<2x128xf32>
    tpu.vector_store %arg13[%c0_48, %c0_49], %86 {strides = array<i32>} : memref<2x128xf32, #tpu.memory_space<vmem>>, vector<2x128xf32>,
    return
  }
  func.func @transform_0(%arg0: i32) -> (i32, i32) {
    %c0_i32 = arith.constant 0 : i32
    %c0_i32_0 = arith.constant 0 : i32
    %c0_i32_1 = arith.constant 0 : i32
    return %c0_i32, %c0_i32_0 : i32, i32
  }
  func.func @transform_1(%arg0: i32) -> (i32, i32) {
    %c0_i32 = arith.constant 0 : i32
    %c0_i32_0 = arith.constant 0 : i32
    %c0_i32_1 = arith.constant 0 : i32
    return %c0_i32, %c0_i32_0 : i32, i32
  }
  func.func @transform_2(%arg0: i32) -> (i32, i32) {
    %c0_i32 = arith.constant 0 : i32
    %c0_i32_0 = arith.constant 0 : i32
    %c0_i32_1 = arith.constant 0 : i32
    return %c0_i32, %c0_i32_0 : i32, i32
  }
  func.func @transform_3(%arg0: i32) -> (i32, i32) {
    %c0_i32 = arith.constant 0 : i32
    %c0_i32_0 = arith.constant 0 : i32
    %c0_i32_1 = arith.constant 0 : i32
    return %c0_i32, %c0_i32_0 : i32, i32
  }
  func.func @transform_4(%arg0: i32) -> (i32, i32, i32) {
    %c0_i32 = arith.constant 0 : i32
    %c0_i32_0 = arith.constant 0 : i32
    %c0_i32_1 = arith.constant 0 : i32
    %c0_i32_2 = arith.constant 0 : i32
    return %c0_i32, %c0_i32_0, %c0_i32_1 : i32, i32, i32
  }
  func.func @transform_5(%arg0: i32) -> (i32, i32) {
    %c0_i32 = arith.constant 0 : i32
    %c0_i32_0 = arith.constant 0 : i32
    %c0_i32_1 = arith.constant 0 : i32
    return %c0_i32, %c0_i32_0 : i32, i32
  }
  func.func @transform_6(%arg0: i32) -> (i32, i32) {
    %c0_i32 = arith.constant 0 : i32
    %c0_i32_0 = arith.constant 0 : i32
    %c0_i32_1 = arith.constant 0 : i32
    return %c0_i32, %c0_i32_0 : i32, i32
  }
  func.func @transform_7(%arg0: i32) -> (i32, i32, i32) {
    %c0_i32 = arith.constant 0 : i32
    %c0_i32_0 = arith.constant 0 : i32
    %c0_i32_1 = arith.constant 0 : i32
    %c0_i32_2 = arith.constant 0 : i32
    return %c0_i32, %c0_i32_0, %c0_i32_1 : i32, i32, i32
  }
  func.func @transform_8(%arg0: i32) -> (i32, i32) {
    %c0_i32 = arith.constant 0 : i32
    %c0_i32_0 = arith.constant 0 : i32
    %c0_i32_1 = arith.constant 0 : i32
    return %c0_i32, %c0_i32_0 : i32, i32
  }
  func.func @transform_9(%arg0: i32) -> (i32, i32) {
    %c0_i32 = arith.constant 0 : i32
    %c0_i32_0 = arith.constant 0 : i32
    %c0_i32_1 = arith.constant 0 : i32
    return %c0_i32, %c0_i32_0 : i32, i32
  }
  func.func @transform_10(%arg0: i32) -> (i32, i32) {
    %c0_i32 = arith.constant 0 : i32
    %c0_i32_0 = arith.constant 0 : i32
    %c0_i32_1 = arith.constant 0 : i32
    return %c0_i32, %c0_i32_0 : i32, i32
  }
  func.func @transform_11(%arg0: i32) -> (i32, i32) {
    %c0_i32 = arith.constant 0 : i32
    %c0_i32_0 = arith.constant 0 : i32
    %c0_i32_1 = arith.constant 0 : i32
    return %c0_i32, %c0_i32_0 : i32, i32
  }
  func.func @transform_12(%arg0: i32) -> (i32, i32) {
    %c0_i32 = arith.constant 0 : i32
    %c0_i32_0 = arith.constant 0 : i32
    %c0_i32_1 = arith.constant 0 : i32
    return %c0_i32, %c0_i32_0 : i32, i32
  }
}

</mosaic_0001>

<llo_original>
// kernel: forward.1
$region0: #{forward.1}
  #allocation0 [shape = 'u32[]', space=smem, size = 0x4, offset = 0x4, fixed_abs, tag = 'smem constant byte address 0x4 - core index']
  #allocation1 [shape = 'u32[72,128]{1,0:T(1,128)}', space=vmem, size = 0x9000, scoped, tag = 'internal scratch']
  %s0 = inlined_call_operand.vmem [shape: f32[32,384], index: 0, kind: input, shape index: {}]
  %s1 = inlined_call_operand.vmem [shape: f32[384,256], index: 1, kind: input, shape index: {}]
  %s2 = inlined_call_operand.vmem [shape: f32[1,256], index: 2, kind: input, shape index: {}]
  %s3 = inlined_call_operand.vmem [shape: f32[20,31], index: 3, kind: input, shape index: {}]
  %s4 = inlined_call_operand.vmem [shape: f32[3,240,256], index: 4, kind: input, shape index: {}]
  %s5 = inlined_call_operand.vmem [shape: f32[1,256], index: 5, kind: input, shape index: {}]
  %s6 = inlined_call_operand.vmem [shape: f32[12,17], index: 6, kind: input, shape index: {}]
  %s7 = inlined_call_operand.vmem [shape: f32[3,224,256], index: 7, kind: input, shape index: {}]
  %s8 = inlined_call_operand.vmem [shape: f32[1,256], index: 8, kind: input, shape index: {}]
  %s9 = inlined_call_operand.vmem [shape: f32[2,7], index: 9, kind: input, shape index: {}]
  %s10 = inlined_call_operand.vmem [shape: f32[64,128], index: 10, kind: input, shape index: {}]
  %s11 = inlined_call_operand.vmem [shape: f32[1,128], index: 11, kind: input, shape index: {}]
  %s12 = inlined_call_operand.hbm [shape: f32[2,128], index: 12, kind: output, shape index: {}]
  %s13 = sld [smem:[#allocation0]]
  $region58: #{forward.1} parent=0
    _
  %s15 = ssub.s32 1, %s13
  %s16 = scalar_select 0, %s15, %s13
  $region1: #{forward.1} parent=0
    #allocation2 [shape = 'u8[1024]{0}', space=vmem, size = 0x400, scoped, tag = 'output window, operand 0, single buffered']
    #allocation3 [shape = 's32[1]{0}', space=sflag, size = 0x4, scoped, tag = 'scoped memory for forward.1']
    %17 = vsyncpa [#allocation3], 0
    // Predicated region
    $region2: #{forward.1} parent=1 // pred_check
      _
    $region3: #{forward.1} parent=1 // pred_check_branch
      %19 = sbr.rel (0) target = $region5
    $region4: #{forward.1} parent=1 // pred_region
      _
    $region5: #{forward.1} parent=1 // pred_fallthru
      _
    // Predicated region
    $region6: #{forward.1} parent=1 // pred_check
      _
    $region7: #{forward.1} parent=1 // pred_check_branch
      %21 = sbr.rel (0) target = $region9
    $region8: #{forward.1} parent=1 // pred_region
      _
    $region9: #{forward.1} parent=1 // pred_fallthru
      _
    // Predicated region
    $region10: #{forward.1} parent=1 // pred_check
      _
    $region11: #{forward.1} parent=1 // pred_check_branch
      %23 = sbr.rel (0) target = $region13
    $region12: #{forward.1} parent=1 // pred_region
      _
    $region13: #{forward.1} parent=1 // pred_fallthru
      _
    // Predicated region
    $region14: #{forward.1} parent=1 // pred_check
      _
    $region15: #{forward.1} parent=1 // pred_check_branch
      %25 = sbr.rel (0) target = $region17
    $region16: #{forward.1} parent=1 // pred_region
      _
    $region17: #{forward.1} parent=1 // pred_fallthru
      _
    // Predicated region
    $region18: #{forward.1} parent=1 // pred_check
      _
    $region19: #{forward.1} parent=1 // pred_check_branch
      %27 = sbr.rel (0) target = $region21
    $region20: #{forward.1} parent=1 // pred_region
      _
    $region21: #{forward.1} parent=1 // pred_fallthru
      _
    // Predicated region
    $region22: #{forward.1} parent=1 // pred_check
      _
    $region23: #{forward.1} parent=1 // pred_check_branch
      %29 = sbr.rel (0) target = $region25
    $region24: #{forward.1} parent=1 // pred_region
      _
    $region25: #{forward.1} parent=1 // pred_fallthru
      _
    // Predicated region
    $region26: #{forward.1} parent=1 // pred_check
      _
    $region27: #{forward.1} parent=1 // pred_check_branch
      %31 = sbr.rel (0) target = $region29
    $region28: #{forward.1} parent=1 // pred_region
      _
    $region29: #{forward.1} parent=1 // pred_fallthru
      _
    // Predicated region
    $region30: #{forward.1} parent=1 // pred_check
      _
    $region31: #{forward.1} parent=1 // pred_check_branch
      %33 = sbr.rel (0) target = $region33
    $region32: #{forward.1} parent=1 // pred_region
      _
    $region33: #{forward.1} parent=1 // pred_fallthru
      _
    // Predicated region
    $region34: #{forward.1} parent=1 // pred_check
      _
    $region35: #{forward.1} parent=1 // pred_check_branch
      %35 = sbr.rel (0) target = $region37
    $region36: #{forward.1} parent=1 // pred_region
      _
    $region37: #{forward.1} parent=1 // pred_fallthru
      _
    // Predicated region
    $region38: #{forward.1} parent=1 // pred_check
      _
    $region39: #{forward.1} parent=1 // pred_check_branch
      %37 = sbr.rel (0) target = $region41
    $region40: #{forward.1} parent=1 // pred_region
      _
    $region41: #{forward.1} parent=1 // pred_fallthru
      _
    // Predicated region
    $region42: #{forward.1} parent=1 // pred_check
      _
    $region43: #{forward.1} parent=1 // pred_check_branch
      %39 = sbr.rel (0) target = $region45
    $region44: #{forward.1} parent=1 // pred_region
      _
    $region45: #{forward.1} parent=1 // pred_fallthru
      _
    // Predicated region
    $region46: #{forward.1} parent=1 // pred_check
      _
    $region47: #{forward.1} parent=1 // pred_check_branch
      %41 = sbr.rel (0) target = $region49
    $region48: #{forward.1} parent=1 // pred_region
      _
    $region49: #{forward.1} parent=1 // pred_fallthru
      _
    %v42 = vld [vmem:[%s0] sm:$0xff]
    %v43 = vld [vmem:[%s0 + $0x8] sm:$0xff]
    %v44 = vld [vmem:[%s0 + $0x10] sm:$0xff]
    %v45 = vld [vmem:[%s0 + $0x18] sm:$0xff]
    %v46 = vld [vmem:[%s0 + $0x20] sm:$0xff]
    %v47 = vld [vmem:[%s0 + $0x28] sm:$0xff]
    %v48 = vld [vmem:[%s0 + $0x30] sm:$0xff]
    %v49 = vld [vmem:[%s0 + $0x38] sm:$0xff]
    %v50 = vld [vmem:[%s0 + $0x40] sm:$0xff]
    %v51 = vld [vmem:[%s0 + $0x48] sm:$0xff]
    %v52 = vld [vmem:[%s0 + $0x50] sm:$0xff]
    %v53 = vld [vmem:[%s0 + $0x58] sm:$0xff]
    %v54 = vld [vmem:[%s1] sm:$0xff]
    %v55 = vld [vmem:[%s1 + $0x8] sm:$0xff]
    %v56 = vld [vmem:[%s1 + $0x10] sm:$0xff]
    %v57 = vld [vmem:[%s1 + $0x18] sm:$0xff]
    %v58 = vld [vmem:[%s1 + $0x20] sm:$0xff]
    %v59 = vld [vmem:[%s1 + $0x28] sm:$0xff]
    %v60 = vld [vmem:[%s1 + $0x30] sm:$0xff]
    %v61 = vld [vmem:[%s1 + $0x38] sm:$0xff]
    %v62 = vld [vmem:[%s1 + $0x40] sm:$0xff]
    %v63 = vld [vmem:[%s1 + $0x48] sm:$0xff]
    %v64 = vld [vmem:[%s1 + $0x50] sm:$0xff]
    %v65 = vld [vmem:[%s1 + $0x58] sm:$0xff]
    %v66 = vld [vmem:[%s1 + $0x60] sm:$0xff]
    %v67 = vld [vmem:[%s1 + $0x68] sm:$0xff]
    %v68 = vld [vmem:[%s1 + $0x70] sm:$0xff]
    %v69 = vld [vmem:[%s1 + $0x78] sm:$0xff]
    %v70 = vld [vmem:[%s1 + $0x80] sm:$0xff]
    %v71 = vld [vmem:[%s1 + $0x88] sm:$0xff]
    %v72 = vld [vmem:[%s1 + $0x90] sm:$0xff]
    %v73 = vld [vmem:[%s1 + $0x98] sm:$0xff]
    %v74 = vld [vmem:[%s1 + $0xa0] sm:$0xff]
    %v75 = vld [vmem:[%s1 + $0xa8] sm:$0xff]
    %v76 = vld [vmem:[%s1 + $0xb0] sm:$0xff]
    %v77 = vld [vmem:[%s1 + $0xb8] sm:$0xff]
    %v78 = vld [vmem:[%s1 + $0xc0] sm:$0xff]
    %v79 = vld [vmem:[%s1 + $0xc8] sm:$0xff]
    %v80 = vld [vmem:[%s1 + $0xd0] sm:$0xff]
    %v81 = vld [vmem:[%s1 + $0xd8] sm:$0xff]
    %v82 = vld [vmem:[%s1 + $0xe0] sm:$0xff]
    %v83 = vld [vmem:[%s1 + $0xe8] sm:$0xff]
    %v84 = vld [vmem:[%s1 + $0xf0] sm:$0xff]
    %v85 = vld [vmem:[%s1 + $0xf8] sm:$0xff]
    %v86 = vld [vmem:[%s1 + $0x100] sm:$0xff]
    %v87 = vld [vmem:[%s1 + $0x108] sm:$0xff]
    %v88 = vld [vmem:[%s1 + $0x110] sm:$0xff]
    %v89 = vld [vmem:[%s1 + $0x118] sm:$0xff]
    %v90 = vld [vmem:[%s1 + $0x120] sm:$0xff]
    %v91 = vld [vmem:[%s1 + $0x128] sm:$0xff]
    %v92 = vld [vmem:[%s1 + $0x130] sm:$0xff]
    %v93 = vld [vmem:[%s1 + $0x138] sm:$0xff]
    %v94 = vld [vmem:[%s1 + $0x140] sm:$0xff]
    %v95 = vld [vmem:[%s1 + $0x148] sm:$0xff]
    %v96 = vld [vmem:[%s1 + $0x150] sm:$0xff]
    %v97 = vld [vmem:[%s1 + $0x158] sm:$0xff]
    %v98 = vld [vmem:[%s1 + $0x160] sm:$0xff]
    %v99 = vld [vmem:[%s1 + $0x168] sm:$0xff]
    %v100 = vld [vmem:[%s1 + $0x170] sm:$0xff]
    %v101 = vld [vmem:[%s1 + $0x178] sm:$0xff]
    %v102 = vld [vmem:[%s1 + $0x180] sm:$0xff]
    %v103 = vld [vmem:[%s1 + $0x188] sm:$0xff]
    %v104 = vld [vmem:[%s1 + $0x190] sm:$0xff]
    %v105 = vld [vmem:[%s1 + $0x198] sm:$0xff]
    %v106 = vld [vmem:[%s1 + $0x1a0] sm:$0xff]
    %v107 = vld [vmem:[%s1 + $0x1a8] sm:$0xff]
    %v108 = vld [vmem:[%s1 + $0x1b0] sm:$0xff]
    %v109 = vld [vmem:[%s1 + $0x1b8] sm:$0xff]
    %v110 = vld [vmem:[%s1 + $0x1c0] sm:$0xff]
    %v111 = vld [vmem:[%s1 + $0x1c8] sm:$0xff]
    %v112 = vld [vmem:[%s1 + $0x1d0] sm:$0xff]
    %v113 = vld [vmem:[%s1 + $0x1d8] sm:$0xff]
    %v114 = vld [vmem:[%s1 + $0x1e0] sm:$0xff]
    %v115 = vld [vmem:[%s1 + $0x1e8] sm:$0xff]
    %v116 = vld [vmem:[%s1 + $0x1f0] sm:$0xff]
    %v117 = vld [vmem:[%s1 + $0x1f8] sm:$0xff]
    %v118 = vld [vmem:[%s1 + $0x200] sm:$0xff]
    %v119 = vld [vmem:[%s1 + $0x208] sm:$0xff]
    %v120 = vld [vmem:[%s1 + $0x210] sm:$0xff]
    %v121 = vld [vmem:[%s1 + $0x218] sm:$0xff]
    %v122 = vld [vmem:[%s1 + $0x220] sm:$0xff]
    %v123 = vld [vmem:[%s1 + $0x228] sm:$0xff]
    %v124 = vld [vmem:[%s1 + $0x230] sm:$0xff]
    %v125 = vld [vmem:[%s1 + $0x238] sm:$0xff]
    %v126 = vld [vmem:[%s1 + $0x240] sm:$0xff]
    %v127 = vld [vmem:[%s1 + $0x248] sm:$0xff]
    %v128 = vld [vmem:[%s1 + $0x250] sm:$0xff]
    %v129 = vld [vmem:[%s1 + $0x258] sm:$0xff]
    %v130 = vld [vmem:[%s1 + $0x260] sm:$0xff]
    %v131 = vld [vmem:[%s1 + $0x268] sm:$0xff]
    %v132 = vld [vmem:[%s1 + $0x270] sm:$0xff]
    %v133 = vld [vmem:[%s1 + $0x278] sm:$0xff]
    %v134 = vld [vmem:[%s1 + $0x280] sm:$0xff]
    %v135 = vld [vmem:[%s1 + $0x288] sm:$0xff]
    %v136 = vld [vmem:[%s1 + $0x290] sm:$0xff]
    %v137 = vld [vmem:[%s1 + $0x298] sm:$0xff]
    %v138 = vld [vmem:[%s1 + $0x2a0] sm:$0xff]
    %v139 = vld [vmem:[%s1 + $0x2a8] sm:$0xff]
    %v140 = vld [vmem:[%s1 + $0x2b0] sm:$0xff]
    %v141 = vld [vmem:[%s1 + $0x2b8] sm:$0xff]
    %v142 = vld [vmem:[%s1 + $0x2c0] sm:$0xff]
    %v143 = vld [vmem:[%s1 + $0x2c8] sm:$0xff]
    %v144 = vld [vmem:[%s1 + $0x2d0] sm:$0xff]
    %v145 = vld [vmem:[%s1 + $0x2d8] sm:$0xff]
    %v146 = vld [vmem:[%s1 + $0x2e0] sm:$0xff]
    %v147 = vld [vmem:[%s1 + $0x2e8] sm:$0xff]
    %v148 = vld [vmem:[%s1 + $0x2f0] sm:$0xff]
    %v149 = vld [vmem:[%s1 + $0x2f8] sm:$0xff]
    %v150 = vld [vmem:[%s2] sm:$0x3]
    %v152 = vperm.slane %v150, 0
    %v153 = vperm.slane %v150, 1
    %156 = vmatpush.msra.mxu0 %v84
    %157 = vmatpush.msra.mxu0 %v82
    %158 = vmatpush.msra.mxu0 %v80
    %159 = vmatpush.msra.mxu0 %v78
    %160 = vmatpush.msra.mxu0 %v76
    %161 = vmatpush.msra.mxu0 %v74
    %162 = vmatpush.msra.mxu0 %v72
    %163 = vmatpush.msra.mxu0 %v70
    %164 = vmatpush.msra.mxu0 %v68
    %165 = vmatpush.msra.mxu0 %v66
    %166 = vmatpush.msra.mxu0 %v64
    %167 = vmatpush.msra.mxu0 %v62
    %168 = vmatpush.msra.mxu0 %v60
    %169 = vmatpush.msra.mxu0 %v58
    %170 = vmatpush.msra.mxu0 %v56
    %171 = vmatpush.msra.mxu0 %v54
    %172 = vmatmul.f32.gmra.mxu0 %v42
    %v173 = vpop.f32.mrf.mxu0
    %v174 = vadd.f32 %v152, %v173
    %175 = vmatmul.f32.gmra.mxu0 %v45
    %v176 = vpop.f32.mrf.mxu0
    %v177 = vadd.f32 %v152, %v176
    %178 = vmatmul.f32.gmra.mxu0 %v48
    %v179 = vpop.f32.mrf.mxu0
    %v180 = vadd.f32 %v152, %v179
    %181 = vmatmul.f32.gmra.mxu0 %v51
    %v182 = vpop.f32.mrf.mxu0
    %v183 = vadd.f32 %v152, %v182
    %184 = vdwg.mxu0
    %185 = vmatpush.msra.mxu0 %v116
    %186 = vmatpush.msra.mxu0 %v114
    %187 = vmatpush.msra.mxu0 %v112
    %188 = vmatpush.msra.mxu0 %v110
    %189 = vmatpush.msra.mxu0 %v108
    %190 = vmatpush.msra.mxu0 %v106
    %191 = vmatpush.msra.mxu0 %v104
    %192 = vmatpush.msra.mxu0 %v102
    %193 = vmatpush.msra.mxu0 %v100
    %194 = vmatpush.msra.mxu0 %v98
    %195 = vmatpush.msra.mxu0 %v96
    %196 = vmatpush.msra.mxu0 %v94
    %197 = vmatpush.msra.mxu0 %v92
    %198 = vmatpush.msra.mxu0 %v90
    %199 = vmatpush.msra.mxu0 %v88
    %200 = vmatpush.msra.mxu0 %v86
    %201 = vmatmul.f32.gmra.mxu0 %v43
    %v202 = vpop.f32.mrf.mxu0
    %v203 = vadd.f32 %v174, %v202
    %204 = vmatmul.f32.gmra.mxu0 %v46
    %v205 = vpop.f32.mrf.mxu0
    %v206 = vadd.f32 %v177, %v205
    %207 = vmatmul.f32.gmra.mxu0 %v49
    %v208 = vpop.f32.mrf.mxu0
    %v209 = vadd.f32 %v180, %v208
    %210 = vmatmul.f32.gmra.mxu0 %v52
    %v211 = vpop.f32.mrf.mxu0
    %v212 = vadd.f32 %v183, %v211
    %213 = vdwg.mxu0
    %214 = vmatpush.msra.mxu0 %v148
    %215 = vmatpush.msra.mxu0 %v146
    %216 = vmatpush.msra.mxu0 %v144
    %217 = vmatpush.msra.mxu0 %v142
    %218 = vmatpush.msra.mxu0 %v140
    %219 = vmatpush.msra.mxu0 %v138
    %220 = vmatpush.msra.mxu0 %v136
    %221 = vmatpush.msra.mxu0 %v134
    %222 = vmatpush.msra.mxu0 %v132
    %223 = vmatpush.msra.mxu0 %v130
    %224 = vmatpush.msra.mxu0 %v128
    %225 = vmatpush.msra.mxu0 %v126
    %226 = vmatpush.msra.mxu0 %v124
    %227 = vmatpush.msra.mxu0 %v122
    %228 = vmatpush.msra.mxu0 %v120
    %229 = vmatpush.msra.mxu0 %v118
    %230 = vmatmul.f32.gmra.mxu0 %v44
    %v231 = vpop.f32.mrf.mxu0
    %v232 = vadd.f32 %v203, %v231
    %233 = vmatmul.f32.gmra.mxu0 %v47
    %v234 = vpop.f32.mrf.mxu0
    %v235 = vadd.f32 %v206, %v234
    %236 = vmatmul.f32.gmra.mxu0 %v50
    %v237 = vpop.f32.mrf.mxu0
    %v238 = vadd.f32 %v209, %v237
    %239 = vmatmul.f32.gmra.mxu0 %v53
    %v240 = vpop.f32.mrf.mxu0
    %v241 = vadd.f32 %v212, %v240
    %242 = vdwg.mxu0
    %243 = vmatpush.msra.mxu0 %v85
    %244 = vmatpush.msra.mxu0 %v83
    %245 = vmatpush.msra.mxu0 %v81
    %246 = vmatpush.msra.mxu0 %v79
    %247 = vmatpush.msra.mxu0 %v77
    %248 = vmatpush.msra.mxu0 %v75
    %249 = vmatpush.msra.mxu0 %v73
    %250 = vmatpush.msra.mxu0 %v71
    %251 = vmatpush.msra.mxu0 %v69
    %252 = vmatpush.msra.mxu0 %v67
    %253 = vmatpush.msra.mxu0 %v65
    %254 = vmatpush.msra.mxu0 %v63
    %255 = vmatpush.msra.mxu0 %v61
    %256 = vmatpush.msra.mxu0 %v59
    %257 = vmatpush.msra.mxu0 %v57
    %258 = vmatpush.msra.mxu0 %v55
    %259 = vmatmul.f32.gmra.mxu0 %v42
    %v260 = vpop.f32.mrf.mxu0
    %v261 = vadd.f32 %v153, %v260
    %262 = vmatmul.f32.gmra.mxu0 %v45
    %v263 = vpop.f32.mrf.mxu0
    %v264 = vadd.f32 %v153, %v263
    %265 = vmatmul.f32.gmra.mxu0 %v48
    %v266 = vpop.f32.mrf.mxu0
    %v267 = vadd.f32 %v153, %v266
    %268 = vmatmul.f32.gmra.mxu0 %v51
    %v269 = vpop.f32.mrf.mxu0
    %v270 = vadd.f32 %v153, %v269
    %271 = vdwg.mxu0
    %272 = vmatpush.msra.mxu0 %v117
    %273 = vmatpush.msra.mxu0 %v115
    %274 = vmatpush.msra.mxu0 %v113
    %275 = vmatpush.msra.mxu0 %v111
    %276 = vmatpush.msra.mxu0 %v109
    %277 = vmatpush.msra.mxu0 %v107
    %278 = vmatpush.msra.mxu0 %v105
    %279 = vmatpush.msra.mxu0 %v103
    %280 = vmatpush.msra.mxu0 %v101
    %281 = vmatpush.msra.mxu0 %v99
    %282 = vmatpush.msra.mxu0 %v97
    %283 = vmatpush.msra.mxu0 %v95
    %284 = vmatpush.msra.mxu0 %v93
    %285 = vmatpush.msra.mxu0 %v91
    %286 = vmatpush.msra.mxu0 %v89
    %287 = vmatpush.msra.mxu0 %v87
    %288 = vmatmul.f32.gmra.mxu0 %v43
    %v289 = vpop.f32.mrf.mxu0
    %v290 = vadd.f32 %v261, %v289
    %291 = vmatmul.f32.gmra.mxu0 %v46
    %v292 = vpop.f32.mrf.mxu0
    %v293 = vadd.f32 %v264, %v292
    %294 = vmatmul.f32.gmra.mxu0 %v49
    %v295 = vpop.f32.mrf.mxu0
    %v296 = vadd.f32 %v267, %v295
    %297 = vmatmul.f32.gmra.mxu0 %v52
    %v298 = vpop.f32.mrf.mxu0
    %v299 = vadd.f32 %v270, %v298
    %300 = vdwg.mxu0
    %301 = vmatpush.msra.mxu0 %v149
    %302 = vmatpush.msra.mxu0 %v147
    %303 = vmatpush.msra.mxu0 %v145
    %304 = vmatpush.msra.mxu0 %v143
    %305 = vmatpush.msra.mxu0 %v141
    %306 = vmatpush.msra.mxu0 %v139
    %307 = vmatpush.msra.mxu0 %v137
    %308 = vmatpush.msra.mxu0 %v135
    %309 = vmatpush.msra.mxu0 %v133
    %310 = vmatpush.msra.mxu0 %v131
    %311 = vmatpush.msra.mxu0 %v129
    %312 = vmatpush.msra.mxu0 %v127
    %313 = vmatpush.msra.mxu0 %v125
    %314 = vmatpush.msra.mxu0 %v123
    %315 = vmatpush.msra.mxu0 %v121
    %316 = vmatpush.msra.mxu0 %v119
    %317 = vmatmul.f32.gmra.mxu0 %v44
    %v318 = vpop.f32.mrf.mxu0
    %v319 = vadd.f32 %v290, %v318
    %320 = vmatmul.f32.gmra.mxu0 %v47
    %v321 = vpop.f32.mrf.mxu0
    %v322 = vadd.f32 %v293, %v321
    %323 = vmatmul.f32.gmra.mxu0 %v50
    %v324 = vpop.f32.mrf.mxu0
    %v325 = vadd.f32 %v296, %v324
    %326 = vmatmul.f32.gmra.mxu0 %v53
    %v327 = vpop.f32.mrf.mxu0
    %v328 = vadd.f32 %v299, %v327
    %329 = vdwg.mxu0
    %v330 = vmax.f32 %v232, 0.0
    %v331 = vmax.f32 %v319, 0.0
    %v332 = vmax.f32 %v235, 0.0
    %v333 = vmax.f32 %v322, 0.0
    %v334 = vmax.f32 %v238, 0.0
    %v335 = vmax.f32 %v325, 0.0
    %v336 = vmax.f32 %v241, 0.0
    %v337 = vmax.f32 %v328, 0.0
    %346 = vrot.lane.b32.xlu0 %v330, 112
    %v347 = vpop.permute.xlu0 %346
    %348 = vrot.lane.b32.xlu0 %v331, 112
    %v349 = vpop.permute.xlu0 %348
    %350 = vrot.lane.b32.xlu0 %v332, 112
    %v351 = vpop.permute.xlu0 %350
    %352 = vrot.lane.b32.xlu0 %v333, 112
    %v353 = vpop.permute.xlu0 %352
    %354 = vrot.lane.b32.xlu0 %v334, 112
    %v355 = vpop.permute.xlu0 %354
    %356 = vrot.lane.b32.xlu0 %v335, 112
    %v357 = vpop.permute.xlu0 %356
    %358 = vrot.lane.b32.xlu0 %v336, 112
    %v359 = vpop.permute.xlu0 %358
    %360 = vrot.lane.b32.xlu0 %v337, 112
    %v361 = vpop.permute.xlu0 %360
    %vm362 = vcmask 916480
    %v363 = vsel %vm362, %v347, %v349
    %v364 = vsel %vm362, %v351, %v353
    %v365 = vsel %vm362, %v355, %v357
    %v366 = vsel %vm362, %v359, %v361
    %v375 = vmax.f32 %v330, %v363
    %v376 = vmax.f32 %v331, %v349
    %v377 = vmax.f32 %v332, %v364
    %v378 = vmax.f32 %v333, %v353
    %v379 = vmax.f32 %v334, %v365
    %v380 = vmax.f32 %v335, %v357
    %v381 = vmax.f32 %v336, %v366
    %v382 = vmax.f32 %v337, %v361
    %vm391 = vcmask 1046528
    %v392 = vrot.slane %v375, 1
    %v393 = vrot.slane %v377, 1
    %v394 = vsel %vm391, %v392, %v393
    %v395 = vrot.slane %v376, 1
    %v396 = vrot.slane %v378, 1
    %v397 = vsel %vm391, %v395, %v396
    %v398 = vrot.slane %v379, 1
    %v399 = vsel %vm391, %v393, %v398
    %v400 = vrot.slane %v380, 1
    %v401 = vsel %vm391, %v396, %v400
    %v402 = vrot.slane %v381, 1
    %v403 = vsel %vm391, %v398, %v402
    %v404 = vrot.slane %v382, 1
    %v405 = vsel %vm391, %v400, %v404
    %v414 = vmax.f32 %v375, %v394
    %v415 = vmax.f32 %v376, %v397
    %v416 = vmax.f32 %v377, %v399
    %v417 = vmax.f32 %v378, %v401
    %v418 = vmax.f32 %v379, %v403
    %v419 = vmax.f32 %v380, %v405
    %v420 = vmax.f32 %v381, %v402
    %v421 = vmax.f32 %v382, %v404
    %v422 = vld [vmem:[%s3] sm:$0xff]
    %v423 = vld [vmem:[%s3 + $0x8] sm:$0xff]
    %v424 = vld [vmem:[%s3 + $0x10] sm:$0xf]
    %vm425 = vcmask 252928
    %v427 = vsel %vm425, %v422, 0
    %v430 = vsel %vm425, %v423, 0
    %v433 = vsel %vm425, %v424, 0
    %v436 = vsel %vm391, %v420, 0
    %v439 = vsel %vm391, %v421, 0
    %441 = vmatpush.msra.mxu0 0.0
    %442 = vmatpush.msra.mxu0 0.0
    %443 = vmatpush.msra.mxu0 0.0
    %444 = vmatpush.msra.mxu0 0.0
    %445 = vmatpush.msra.mxu0 0.0
    %446 = vmatpush.msra.mxu0 0.0
    %447 = vmatpush.msra.mxu0 0.0
    %448 = vmatpush.msra.mxu0 0.0
    %449 = vmatpush.msra.mxu0 0.0
    %450 = vmatpush.msra.mxu0 0.0
    %451 = vmatpush.msra.mxu0 0.0
    %452 = vmatpush.msra.mxu0 0.0
    %453 = vmatpush.msra.mxu0 %v436
    %454 = vmatpush.msra.mxu0 %v418
    %455 = vmatpush.msra.mxu0 %v416
    %456 = vmatpush.msra.mxu0 %v414
    %457 = vmatmul.f32.gmra.mxu0 %v427
    %v458 = vpop.f32.mrf.mxu0
    %v459 = vadd.f32 0.0, %v458
    %460 = vmatmul.f32.gmra.mxu0 %v430
    %v461 = vpop.f32.mrf.mxu0
    %v462 = vadd.f32 0.0, %v461
    %463 = vmatmul.f32.gmra.mxu0 %v433
    %v464 = vpop.f32.mrf.mxu0
    %v465 = vadd.f32 0.0, %v464
    %466 = vdwg.mxu0
    %467 = vmatpush.msra.mxu0 0.0
    %468 = vmatpush.msra.mxu0 0.0
    %469 = vmatpush.msra.mxu0 0.0
    %470 = vmatpush.msra.mxu0 0.0
    %471 = vmatpush.msra.mxu0 0.0
    %472 = vmatpush.msra.mxu0 0.0
    %473 = vmatpush.msra.mxu0 0.0
    %474 = vmatpush.msra.mxu0 0.0
    %475 = vmatpush.msra.mxu0 0.0
    %476 = vmatpush.msra.mxu0 0.0
    %477 = vmatpush.msra.mxu0 0.0
    %478 = vmatpush.msra.mxu0 0.0
    %479 = vmatpush.msra.mxu0 %v439
    %480 = vmatpush.msra.mxu0 %v419
    %481 = vmatpush.msra.mxu0 %v417
    %482 = vmatpush.msra.mxu0 %v415
    %483 = vmatmul.f32.gmra.mxu0 %v427
    %v484 = vpop.f32.mrf.mxu0
    %v485 = vadd.f32 0.0, %v484
    %486 = vmatmul.f32.gmra.mxu0 %v430
    %v487 = vpop.f32.mrf.mxu0
    %v488 = vadd.f32 0.0, %v487
    %489 = vmatmul.f32.gmra.mxu0 %v433
    %v490 = vpop.f32.mrf.mxu0
    %v491 = vadd.f32 0.0, %v490
    %492 = vdwg.mxu0
    %v493 = vld [vmem:[%s4] sm:$0xff]
    %v494 = vld [vmem:[%s4 + $0x8] sm:$0xff]
    %v495 = vld [vmem:[%s4 + $0x10] sm:$0xff]
    %v496 = vld [vmem:[%s4 + $0x18] sm:$0xff]
    %v497 = vld [vmem:[%s4 + $0x20] sm:$0xff]
    %v498 = vld [vmem:[%s4 + $0x28] sm:$0xff]
    %v499 = vld [vmem:[%s4 + $0x30] sm:$0xff]
    %v500 = vld [vmem:[%s4 + $0x38] sm:$0xff]
    %v501 = vld [vmem:[%s4 + $0x40] sm:$0xff]
    %v502 = vld [vmem:[%s4 + $0x48] sm:$0xff]
    %v503 = vld [vmem:[%s4 + $0x50] sm:$0xff]
    %v504 = vld [vmem:[%s4 + $0x58] sm:$0xff]
    %v505 = vld [vmem:[%s4 + $0x60] sm:$0xff]
    %v506 = vld [vmem:[%s4 + $0x68] sm:$0xff]
    %v507 = vld [vmem:[%s4 + $0x70] sm:$0xff]
    %v508 = vld [vmem:[%s4 + $0x78] sm:$0xff]
    %v509 = vld [vmem:[%s4 + $0x80] sm:$0xff]
    %v510 = vld [vmem:[%s4 + $0x88] sm:$0xff]
    %v511 = vld [vmem:[%s4 + $0x90] sm:$0xff]
    %v512 = vld [vmem:[%s4 + $0x98] sm:$0xff]
    %v513 = vld [vmem:[%s4 + $0xa0] sm:$0xff]
    %v514 = vld [vmem:[%s4 + $0xa8] sm:$0xff]
    %v515 = vld [vmem:[%s4 + $0xb0] sm:$0xff]
    %v516 = vld [vmem:[%s4 + $0xb8] sm:$0xff]
    %v517 = vld [vmem:[%s4 + $0xc0] sm:$0xff]
    %v518 = vld [vmem:[%s4 + $0xc8] sm:$0xff]
    %v519 = vld [vmem:[%s4 + $0xd0] sm:$0xff]
    %v520 = vld [vmem:[%s4 + $0xd8] sm:$0xff]
    %v521 = vld [vmem:[%s4 + $0xe0] sm:$0xff]
    %v522 = vld [vmem:[%s4 + $0xe8] sm:$0xff]
    %v523 = vld [vmem:[%s4 + $0xf0] sm:$0xff]
    %v524 = vld [vmem:[%s4 + $0xf8] sm:$0xff]
    %v525 = vld [vmem:[%s4 + $0x100] sm:$0xff]
    %v526 = vld [vmem:[%s4 + $0x108] sm:$0xff]
    %v527 = vld [vmem:[%s4 + $0x110] sm:$0xff]
    %v528 = vld [vmem:[%s4 + $0x118] sm:$0xff]
    %v529 = vld [vmem:[%s4 + $0x120] sm:$0xff]
    %v530 = vld [vmem:[%s4 + $0x128] sm:$0xff]
    %v531 = vld [vmem:[%s4 + $0x130] sm:$0xff]
    %v532 = vld [vmem:[%s4 + $0x138] sm:$0xff]
    %v533 = vld [vmem:[%s4 + $0x140] sm:$0xff]
    %v534 = vld [vmem:[%s4 + $0x148] sm:$0xff]
    %v535 = vld [vmem:[%s4 + $0x150] sm:$0xff]
    %v536 = vld [vmem:[%s4 + $0x158] sm:$0xff]
    %v537 = vld [vmem:[%s4 + $0x160] sm:$0xff]
    %v538 = vld [vmem:[%s4 + $0x168] sm:$0xff]
    %v539 = vld [vmem:[%s4 + $0x170] sm:$0xff]
    %v540 = vld [vmem:[%s4 + $0x178] sm:$0xff]
    %v541 = vld [vmem:[%s4 + $0x180] sm:$0xff]
    %v542 = vld [vmem:[%s4 + $0x188] sm:$0xff]
    %v543 = vld [vmem:[%s4 + $0x190] sm:$0xff]
    %v544 = vld [vmem:[%s4 + $0x198] sm:$0xff]
    %v545 = vld [vmem:[%s4 + $0x1a0] sm:$0xff]
    %v546 = vld [vmem:[%s4 + $0x1a8] sm:$0xff]
    %v547 = vld [vmem:[%s4 + $0x1b0] sm:$0xff]
    %v548 = vld [vmem:[%s4 + $0x1b8] sm:$0xff]
    %v549 = vld [vmem:[%s4 + $0x1c0] sm:$0xff]
    %v550 = vld [vmem:[%s4 + $0x1c8] sm:$0xff]
    %v551 = vld [vmem:[%s4 + $0x1d0] sm:$0xff]
    %v552 = vld [vmem:[%s4 + $0x1d8] sm:$0xff]
    %s553 = scalar_lea.vmem %s4, 480
    %v554 = vld [vmem:[%s553] sm:$0xff]
    %v555 = vld [vmem:[%s553 + $0x8] sm:$0xff]
    %v556 = vld [vmem:[%s553 + $0x10] sm:$0xff]
    %v557 = vld [vmem:[%s553 + $0x18] sm:$0xff]
    %v558 = vld [vmem:[%s553 + $0x20] sm:$0xff]
    %v559 = vld [vmem:[%s553 + $0x28] sm:$0xff]
    %v560 = vld [vmem:[%s553 + $0x30] sm:$0xff]
    %v561 = vld [vmem:[%s553 + $0x38] sm:$0xff]
    %v562 = vld [vmem:[%s553 + $0x40] sm:$0xff]
    %v563 = vld [vmem:[%s553 + $0x48] sm:$0xff]
    %v564 = vld [vmem:[%s553 + $0x50] sm:$0xff]
    %v565 = vld [vmem:[%s553 + $0x58] sm:$0xff]
    %v566 = vld [vmem:[%s553 + $0x60] sm:$0xff]
    %v567 = vld [vmem:[%s553 + $0x68] sm:$0xff]
    %v568 = vld [vmem:[%s553 + $0x70] sm:$0xff]
    %v569 = vld [vmem:[%s553 + $0x78] sm:$0xff]
    %v570 = vld [vmem:[%s553 + $0x80] sm:$0xff]
    %v571 = vld [vmem:[%s553 + $0x88] sm:$0xff]
    %v572 = vld [vmem:[%s553 + $0x90] sm:$0xff]
    %v573 = vld [vmem:[%s553 + $0x98] sm:$0xff]
    %v574 = vld [vmem:[%s553 + $0xa0] sm:$0xff]
    %v575 = vld [vmem:[%s553 + $0xa8] sm:$0xff]
    %v576 = vld [vmem:[%s553 + $0xb0] sm:$0xff]
    %v577 = vld [vmem:[%s553 + $0xb8] sm:$0xff]
    %v578 = vld [vmem:[%s553 + $0xc0] sm:$0xff]
    %v579 = vld [vmem:[%s553 + $0xc8] sm:$0xff]
    %v580 = vld [vmem:[%s553 + $0xd0] sm:$0xff]
    %v581 = vld [vmem:[%s553 + $0xd8] sm:$0xff]
    %v582 = vld [vmem:[%s553 + $0xe0] sm:$0xff]
    %v583 = vld [vmem:[%s553 + $0xe8] sm:$0xff]
    %v584 = vld [vmem:[%s553 + $0xf0] sm:$0xff]
    %v585 = vld [vmem:[%s553 + $0xf8] sm:$0xff]
    %v586 = vld [vmem:[%s553 + $0x100] sm:$0xff]
    %v587 = vld [vmem:[%s553 + $0x108] sm:$0xff]
    %v588 = vld [vmem:[%s553 + $0x110] sm:$0xff]
    %v589 = vld [vmem:[%s553 + $0x118] sm:$0xff]
    %v590 = vld [vmem:[%s553 + $0x120] sm:$0xff]
    %v591 = vld [vmem:[%s553 + $0x128] sm:$0xff]
    %v592 = vld [vmem:[%s553 + $0x130] sm:$0xff]
    %v593 = vld [vmem:[%s553 + $0x138] sm:$0xff]
    %v594 = vld [vmem:[%s553 + $0x140] sm:$0xff]
    %v595 = vld [vmem:[%s553 + $0x148] sm:$0xff]
    %v596 = vld [vmem:[%s553 + $0x150] sm:$0xff]
    %v597 = vld [vmem:[%s553 + $0x158] sm:$0xff]
    %v598 = vld [vmem:[%s553 + $0x160] sm:$0xff]
    %v599 = vld [vmem:[%s553 + $0x168] sm:$0xff]
    %v600 = vld [vmem:[%s553 + $0x170] sm:$0xff]
    %v601 = vld [vmem:[%s553 + $0x178] sm:$0xff]
    %v602 = vld [vmem:[%s553 + $0x180] sm:$0xff]
    %v603 = vld [vmem:[%s553 + $0x188] sm:$0xff]
    %v604 = vld [vmem:[%s553 + $0x190] sm:$0xff]
    %v605 = vld [vmem:[%s553 + $0x198] sm:$0xff]
    %v606 = vld [vmem:[%s553 + $0x1a0] sm:$0xff]
    %v607 = vld [vmem:[%s553 + $0x1a8] sm:$0xff]
    %v608 = vld [vmem:[%s553 + $0x1b0] sm:$0xff]
    %v609 = vld [vmem:[%s553 + $0x1b8] sm:$0xff]
    %v610 = vld [vmem:[%s553 + $0x1c0] sm:$0xff]
    %v611 = vld [vmem:[%s553 + $0x1c8] sm:$0xff]
    %v612 = vld [vmem:[%s553 + $0x1d0] sm:$0xff]
    %v613 = vld [vmem:[%s553 + $0x1d8] sm:$0xff]
    %v620 = vrot.slane %v459, 1
    %v621 = vrot.slane %v462, 1
    %v622 = vsel %vm391, %v620, %v621
    %v623 = vrot.slane %v485, 1
    %v624 = vrot.slane %v488, 1
    %v625 = vsel %vm391, %v623, %v624
    %v626 = vrot.slane %v465, 1
    %v627 = vsel %vm391, %v621, %v626
    %v628 = vrot.slane %v491, 1
    %v629 = vsel %vm391, %v624, %v628
    %v633 = vsel %vm362, %v625, 0
    %v635 = vsel %vm362, %v629, 0
    %v637 = vsel %vm362, %v628, 0
    %639 = vmatpush.msra.mxu0 %v584
    %640 = vmatpush.msra.mxu0 %v582
    %641 = vmatpush.msra.mxu0 %v580
    %642 = vmatpush.msra.mxu0 %v578
    %643 = vmatpush.msra.mxu0 %v576
    %644 = vmatpush.msra.mxu0 %v574
    %645 = vmatpush.msra.mxu0 %v572
    %646 = vmatpush.msra.mxu0 %v570
    %647 = vmatpush.msra.mxu0 %v568
    %648 = vmatpush.msra.mxu0 %v566
    %649 = vmatpush.msra.mxu0 %v564
    %650 = vmatpush.msra.mxu0 %v562
    %651 = vmatpush.msra.mxu0 %v560
    %652 = vmatpush.msra.mxu0 %v558
    %653 = vmatpush.msra.mxu0 %v556
    %654 = vmatpush.msra.mxu0 %v554
    %655 = vmatmul.f32.gmra.mxu0 %v622
    %v656 = vpop.f32.mrf.mxu0
    %v657 = vadd.f32 0.0, %v656
    %658 = vmatmul.f32.gmra.mxu0 %v627
    %v659 = vpop.f32.mrf.mxu0
    %v660 = vadd.f32 0.0, %v659
    %661 = vmatmul.f32.gmra.mxu0 %v626
    %v662 = vpop.f32.mrf.mxu0
    %v663 = vadd.f32 0.0, %v662
    %664 = vdwg.mxu0
    %665 = vmatpush.msra.mxu0 0.0
    %666 = vmatpush.msra.mxu0 0.0
    %667 = vmatpush.msra.mxu0 %v612
    %668 = vmatpush.msra.mxu0 %v610
    %669 = vmatpush.msra.mxu0 %v608
    %670 = vmatpush.msra.mxu0 %v606
    %671 = vmatpush.msra.mxu0 %v604
    %672 = vmatpush.msra.mxu0 %v602
    %673 = vmatpush.msra.mxu0 %v600
    %674 = vmatpush.msra.mxu0 %v598
    %675 = vmatpush.msra.mxu0 %v596
    %676 = vmatpush.msra.mxu0 %v594
    %677 = vmatpush.msra.mxu0 %v592
    %678 = vmatpush.msra.mxu0 %v590
    %679 = vmatpush.msra.mxu0 %v588
    %680 = vmatpush.msra.mxu0 %v586
    %681 = vmatmul.f32.gmra.mxu0 %v633
    %v682 = vpop.f32.mrf.mxu0
    %v683 = vadd.f32 %v657, %v682
    %684 = vmatmul.f32.gmra.mxu0 %v635
    %v685 = vpop.f32.mrf.mxu0
    %v686 = vadd.f32 %v660, %v685
    %687 = vmatmul.f32.gmra.mxu0 %v637
    %v688 = vpop.f32.mrf.mxu0
    %v689 = vadd.f32 %v663, %v688
    %690 = vdwg.mxu0
    %691 = vmatpush.msra.mxu0 %v585
    %692 = vmatpush.msra.mxu0 %v583
    %693 = vmatpush.msra.mxu0 %v581
    %694 = vmatpush.msra.mxu0 %v579
    %695 = vmatpush.msra.mxu0 %v577
    %696 = vmatpush.msra.mxu0 %v575
    %697 = vmatpush.msra.mxu0 %v573
    %698 = vmatpush.msra.mxu0 %v571
    %699 = vmatpush.msra.mxu0 %v569
    %700 = vmatpush.msra.mxu0 %v567
    %701 = vmatpush.msra.mxu0 %v565
    %702 = vmatpush.msra.mxu0 %v563
    %703 = vmatpush.msra.mxu0 %v561
    %704 = vmatpush.msra.mxu0 %v559
    %705 = vmatpush.msra.mxu0 %v557
    %706 = vmatpush.msra.mxu0 %v555
    %707 = vmatmul.f32.gmra.mxu0 %v622
    %v708 = vpop.f32.mrf.mxu0
    %v709 = vadd.f32 0.0, %v708
    %710 = vmatmul.f32.gmra.mxu0 %v627
    %v711 = vpop.f32.mrf.mxu0
    %v712 = vadd.f32 0.0, %v711
    %713 = vmatmul.f32.gmra.mxu0 %v626
    %v714 = vpop.f32.mrf.mxu0
    %v715 = vadd.f32 0.0, %v714
    %716 = vdwg.mxu0
    %717 = vmatpush.msra.mxu0 0.0
    %718 = vmatpush.msra.mxu0 0.0
    %719 = vmatpush.msra.mxu0 %v613
    %720 = vmatpush.msra.mxu0 %v611
    %721 = vmatpush.msra.mxu0 %v609
    %722 = vmatpush.msra.mxu0 %v607
    %723 = vmatpush.msra.mxu0 %v605
    %724 = vmatpush.msra.mxu0 %v603
    %725 = vmatpush.msra.mxu0 %v601
    %726 = vmatpush.msra.mxu0 %v599
    %727 = vmatpush.msra.mxu0 %v597
    %728 = vmatpush.msra.mxu0 %v595
    %729 = vmatpush.msra.mxu0 %v593
    %730 = vmatpush.msra.mxu0 %v591
    %731 = vmatpush.msra.mxu0 %v589
    %732 = vmatpush.msra.mxu0 %v587
    %733 = vmatmul.f32.gmra.mxu0 %v633
    %v734 = vpop.f32.mrf.mxu0
    %v735 = vadd.f32 %v709, %v734
    %736 = vmatmul.f32.gmra.mxu0 %v635
    %v737 = vpop.f32.mrf.mxu0
    %v738 = vadd.f32 %v712, %v737
    %739 = vmatmul.f32.gmra.mxu0 %v637
    %v740 = vpop.f32.mrf.mxu0
    %v741 = vadd.f32 %v715, %v740
    %742 = vdwg.mxu0
    %v743 = vsel %vm362, %v485, 0
    %v745 = vsel %vm362, %v488, 0
    %v747 = vsel %vm362, %v491, 0
    %749 = vmatpush.msra.mxu0 %v523
    %750 = vmatpush.msra.mxu0 %v521
    %751 = vmatpush.msra.mxu0 %v519
    %752 = vmatpush.msra.mxu0 %v517
    %753 = vmatpush.msra.mxu0 %v515
    %754 = vmatpush.msra.mxu0 %v513
    %755 = vmatpush.msra.mxu0 %v511
    %756 = vmatpush.msra.mxu0 %v509
    %757 = vmatpush.msra.mxu0 %v507
    %758 = vmatpush.msra.mxu0 %v505
    %759 = vmatpush.msra.mxu0 %v503
    %760 = vmatpush.msra.mxu0 %v501
    %761 = vmatpush.msra.mxu0 %v499
    %762 = vmatpush.msra.mxu0 %v497
    %763 = vmatpush.msra.mxu0 %v495
    %764 = vmatpush.msra.mxu0 %v493
    %765 = vmatmul.f32.gmra.mxu0 %v459
    %v766 = vpop.f32.mrf.mxu0
    %v767 = vadd.f32 %v683, %v766
    %768 = vmatmul.f32.gmra.mxu0 %v462
    %v769 = vpop.f32.mrf.mxu0
    %v770 = vadd.f32 %v686, %v769
    %771 = vmatmul.f32.gmra.mxu0 %v465
    %v772 = vpop.f32.mrf.mxu0
    %v773 = vadd.f32 %v689, %v772
    %774 = vdwg.mxu0
    %775 = vmatpush.msra.mxu0 0.0
    %776 = vmatpush.msra.mxu0 0.0
    %777 = vmatpush.msra.mxu0 %v551
    %778 = vmatpush.msra.mxu0 %v549
    %779 = vmatpush.msra.mxu0 %v547
    %780 = vmatpush.msra.mxu0 %v545
    %781 = vmatpush.msra.mxu0 %v543
    %782 = vmatpush.msra.mxu0 %v541
    %783 = vmatpush.msra.mxu0 %v539
    %784 = vmatpush.msra.mxu0 %v537
    %785 = vmatpush.msra.mxu0 %v535
    %786 = vmatpush.msra.mxu0 %v533
    %787 = vmatpush.msra.mxu0 %v531
    %788 = vmatpush.msra.mxu0 %v529
    %789 = vmatpush.msra.mxu0 %v527
    %790 = vmatpush.msra.mxu0 %v525
    %791 = vmatmul.f32.gmra.mxu0 %v743
    %v792 = vpop.f32.mrf.mxu0
    %v793 = vadd.f32 %v767, %v792
    %794 = vmatmul.f32.gmra.mxu0 %v745
    %v795 = vpop.f32.mrf.mxu0
    %v796 = vadd.f32 %v770, %v795
    %797 = vmatmul.f32.gmra.mxu0 %v747
    %v798 = vpop.f32.mrf.mxu0
    %v799 = vadd.f32 %v773, %v798
    %800 = vdwg.mxu0
    %801 = vmatpush.msra.mxu0 %v524
    %802 = vmatpush.msra.mxu0 %v522
    %803 = vmatpush.msra.mxu0 %v520
    %804 = vmatpush.msra.mxu0 %v518
    %805 = vmatpush.msra.mxu0 %v516
    %806 = vmatpush.msra.mxu0 %v514
    %807 = vmatpush.msra.mxu0 %v512
    %808 = vmatpush.msra.mxu0 %v510
    %809 = vmatpush.msra.mxu0 %v508
    %810 = vmatpush.msra.mxu0 %v506
    %811 = vmatpush.msra.mxu0 %v504
    %812 = vmatpush.msra.mxu0 %v502
    %813 = vmatpush.msra.mxu0 %v500
    %814 = vmatpush.msra.mxu0 %v498
    %815 = vmatpush.msra.mxu0 %v496
    %816 = vmatpush.msra.mxu0 %v494
    %817 = vmatmul.f32.gmra.mxu0 %v459
    %v818 = vpop.f32.mrf.mxu0
    %v819 = vadd.f32 %v735, %v818
    %820 = vmatmul.f32.gmra.mxu0 %v462
    %v821 = vpop.f32.mrf.mxu0
    %v822 = vadd.f32 %v738, %v821
    %823 = vmatmul.f32.gmra.mxu0 %v465
    %v824 = vpop.f32.mrf.mxu0
    %v825 = vadd.f32 %v741, %v824
    %826 = vdwg.mxu0
    %827 = vmatpush.msra.mxu0 0.0
    %828 = vmatpush.msra.mxu0 0.0
    %829 = vmatpush.msra.mxu0 %v552
    %830 = vmatpush.msra.mxu0 %v550
    %831 = vmatpush.msra.mxu0 %v548
    %832 = vmatpush.msra.mxu0 %v546
    %833 = vmatpush.msra.mxu0 %v544
    %834 = vmatpush.msra.mxu0 %v542
    %835 = vmatpush.msra.mxu0 %v540
    %836 = vmatpush.msra.mxu0 %v538
    %837 = vmatpush.msra.mxu0 %v536
    %838 = vmatpush.msra.mxu0 %v534
    %839 = vmatpush.msra.mxu0 %v532
    %840 = vmatpush.msra.mxu0 %v530
    %841 = vmatpush.msra.mxu0 %v528
    %842 = vmatpush.msra.mxu0 %v526
    %843 = vmatmul.f32.gmra.mxu0 %v743
    %v844 = vpop.f32.mrf.mxu0
    %v845 = vadd.f32 %v819, %v844
    %846 = vmatmul.f32.gmra.mxu0 %v745
    %v847 = vpop.f32.mrf.mxu0
    %v848 = vadd.f32 %v822, %v847
    %849 = vmatmul.f32.gmra.mxu0 %v747
    %v850 = vpop.f32.mrf.mxu0
    %v851 = vadd.f32 %v825, %v850
    %852 = vdwg.mxu0
    %s853 = scalar_lea.vmem %s4, 960
    %v854 = vld [vmem:[%s853] sm:$0xff]
    %v855 = vld [vmem:[%s853 + $0x8] sm:$0xff]
    %v856 = vld [vmem:[%s853 + $0x10] sm:$0xff]
    %v857 = vld [vmem:[%s853 + $0x18] sm:$0xff]
    %v858 = vld [vmem:[%s853 + $0x20] sm:$0xff]
    %v859 = vld [vmem:[%s853 + $0x28] sm:$0xff]
    %v860 = vld [vmem:[%s853 + $0x30] sm:$0xff]
    %v861 = vld [vmem:[%s853 + $0x38] sm:$0xff]
    %v862 = vld [vmem:[%s853 + $0x40] sm:$0xff]
    %v863 = vld [vmem:[%s853 + $0x48] sm:$0xff]
    %v864 = vld [vmem:[%s853 + $0x50] sm:$0xff]
    %v865 = vld [vmem:[%s853 + $0x58] sm:$0xff]
    %v866 = vld [vmem:[%s853 + $0x60] sm:$0xff]
    %v867 = vld [vmem:[%s853 + $0x68] sm:$0xff]
    %v868 = vld [vmem:[%s853 + $0x70] sm:$0xff]
    %v869 = vld [vmem:[%s853 + $0x78] sm:$0xff]
    %v870 = vld [vmem:[%s853 + $0x80] sm:$0xff]
    %v871 = vld [vmem:[%s853 + $0x88] sm:$0xff]
    %v872 = vld [vmem:[%s853 + $0x90] sm:$0xff]
    %v873 = vld [vmem:[%s853 + $0x98] sm:$0xff]
    %v874 = vld [vmem:[%s853 + $0xa0] sm:$0xff]
    %v875 = vld [vmem:[%s853 + $0xa8] sm:$0xff]
    %v876 = vld [vmem:[%s853 + $0xb0] sm:$0xff]
    %v877 = vld [vmem:[%s853 + $0xb8] sm:$0xff]
    %v878 = vld [vmem:[%s853 + $0xc0] sm:$0xff]
    %v879 = vld [vmem:[%s853 + $0xc8] sm:$0xff]
    %v880 = vld [vmem:[%s853 + $0xd0] sm:$0xff]
    %v881 = vld [vmem:[%s853 + $0xd8] sm:$0xff]
    %v882 = vld [vmem:[%s853 + $0xe0] sm:$0xff]
    %v883 = vld [vmem:[%s853 + $0xe8] sm:$0xff]
    %v884 = vld [vmem:[%s853 + $0xf0] sm:$0xff]
    %v885 = vld [vmem:[%s853 + $0xf8] sm:$0xff]
    %v886 = vld [vmem:[%s853 + $0x100] sm:$0xff]
    %v887 = vld [vmem:[%s853 + $0x108] sm:$0xff]
    %v888 = vld [vmem:[%s853 + $0x110] sm:$0xff]
    %v889 = vld [vmem:[%s853 + $0x118] sm:$0xff]
    %v890 = vld [vmem:[%s853 + $0x120] sm:$0xff]
    %v891 = vld [vmem:[%s853 + $0x128] sm:$0xff]
    %v892 = vld [vmem:[%s853 + $0x130] sm:$0xff]
    %v893 = vld [vmem:[%s853 + $0x138] sm:$0xff]
    %v894 = vld [vmem:[%s853 + $0x140] sm:$0xff]
    %v895 = vld [vmem:[%s853 + $0x148] sm:$0xff]
    %v896 = vld [vmem:[%s853 + $0x150] sm:$0xff]
    %v897 = vld [vmem:[%s853 + $0x158] sm:$0xff]
    %v898 = vld [vmem:[%s853 + $0x160] sm:$0xff]
    %v899 = vld [vmem:[%s853 + $0x168] sm:$0xff]
    %v900 = vld [vmem:[%s853 + $0x170] sm:$0xff]
    %v901 = vld [vmem:[%s853 + $0x178] sm:$0xff]
    %v902 = vld [vmem:[%s853 + $0x180] sm:$0xff]
    %v903 = vld [vmem:[%s853 + $0x188] sm:$0xff]
    %v904 = vld [vmem:[%s853 + $0x190] sm:$0xff]
    %v905 = vld [vmem:[%s853 + $0x198] sm:$0xff]
    %v906 = vld [vmem:[%s853 + $0x1a0] sm:$0xff]
    %v907 = vld [vmem:[%s853 + $0x1a8] sm:$0xff]
    %v908 = vld [vmem:[%s853 + $0x1b0] sm:$0xff]
    %v909 = vld [vmem:[%s853 + $0x1b8] sm:$0xff]
    %v910 = vld [vmem:[%s853 + $0x1c0] sm:$0xff]
    %v911 = vld [vmem:[%s853 + $0x1c8] sm:$0xff]
    %v912 = vld [vmem:[%s853 + $0x1d0] sm:$0xff]
    %v913 = vld [vmem:[%s853 + $0x1d8] sm:$0xff]
    %vm914 = vcmask 1045504
    %v915 = vrot.slane %v459, 2
    %v916 = vrot.slane %v462, 2
    %v917 = vsel %vm914, %v915, %v916
    %v918 = vrot.slane %v485, 2
    %v919 = vrot.slane %v488, 2
    %v920 = vsel %vm914, %v918, %v919
    %v921 = vrot.slane %v465, 2
    %v922 = vsel %vm914, %v916, %v921
    %v923 = vrot.slane %v491, 2
    %v924 = vsel %vm914, %v919, %v923
    %v928 = vsel %vm362, %v920, 0
    %v930 = vsel %vm362, %v924, 0
    %v932 = vsel %vm362, %v923, 0
    %934 = vmatpush.msra.mxu0 %v884
    %935 = vmatpush.msra.mxu0 %v882
    %936 = vmatpush.msra.mxu0 %v880
    %937 = vmatpush.msra.mxu0 %v878
    %938 = vmatpush.msra.mxu0 %v876
    %939 = vmatpush.msra.mxu0 %v874
    %940 = vmatpush.msra.mxu0 %v872
    %941 = vmatpush.msra.mxu0 %v870
    %942 = vmatpush.msra.mxu0 %v868
    %943 = vmatpush.msra.mxu0 %v866
    %944 = vmatpush.msra.mxu0 %v864
    %945 = vmatpush.msra.mxu0 %v862
    %946 = vmatpush.msra.mxu0 %v860
    %947 = vmatpush.msra.mxu0 %v858
    %948 = vmatpush.msra.mxu0 %v856
    %949 = vmatpush.msra.mxu0 %v854
    %950 = vmatmul.f32.gmra.mxu0 %v917
    %v951 = vpop.f32.mrf.mxu0
    %v952 = vadd.f32 0.0, %v951
    %953 = vmatmul.f32.gmra.mxu0 %v922
    %v954 = vpop.f32.mrf.mxu0
    %v955 = vadd.f32 0.0, %v954
    %956 = vmatmul.f32.gmra.mxu0 %v921
    %v957 = vpop.f32.mrf.mxu0
    %v958 = vadd.f32 0.0, %v957
    %959 = vdwg.mxu0
    %960 = vmatpush.msra.mxu0 0.0
    %961 = vmatpush.msra.mxu0 0.0
    %962 = vmatpush.msra.mxu0 %v912
    %963 = vmatpush.msra.mxu0 %v910
    %964 = vmatpush.msra.mxu0 %v908
    %965 = vmatpush.msra.mxu0 %v906
    %966 = vmatpush.msra.mxu0 %v904
    %967 = vmatpush.msra.mxu0 %v902
    %968 = vmatpush.msra.mxu0 %v900
    %969 = vmatpush.msra.mxu0 %v898
    %970 = vmatpush.msra.mxu0 %v896
    %971 = vmatpush.msra.mxu0 %v894
    %972 = vmatpush.msra.mxu0 %v892
    %973 = vmatpush.msra.mxu0 %v890
    %974 = vmatpush.msra.mxu0 %v888
    %975 = vmatpush.msra.mxu0 %v886
    %976 = vmatmul.f32.gmra.mxu0 %v928
    %v977 = vpop.f32.mrf.mxu0
    %v978 = vadd.f32 %v952, %v977
    %979 = vmatmul.f32.gmra.mxu0 %v930
    %v980 = vpop.f32.mrf.mxu0
    %v981 = vadd.f32 %v955, %v980
    %982 = vmatmul.f32.gmra.mxu0 %v932
    %v983 = vpop.f32.mrf.mxu0
    %v984 = vadd.f32 %v958, %v983
    %985 = vdwg.mxu0
    %986 = vmatpush.msra.mxu0 %v885
    %987 = vmatpush.msra.mxu0 %v883
    %988 = vmatpush.msra.mxu0 %v881
    %989 = vmatpush.msra.mxu0 %v879
    %990 = vmatpush.msra.mxu0 %v877
    %991 = vmatpush.msra.mxu0 %v875
    %992 = vmatpush.msra.mxu0 %v873
    %993 = vmatpush.msra.mxu0 %v871
    %994 = vmatpush.msra.mxu0 %v869
    %995 = vmatpush.msra.mxu0 %v867
    %996 = vmatpush.msra.mxu0 %v865
    %997 = vmatpush.msra.mxu0 %v863
    %998 = vmatpush.msra.mxu0 %v861
    %999 = vmatpush.msra.mxu0 %v859
    %1000 = vmatpush.msra.mxu0 %v857
    %1001 = vmatpush.msra.mxu0 %v855
    %1002 = vmatmul.f32.gmra.mxu0 %v917
    %v1003 = vpop.f32.mrf.mxu0
    %v1004 = vadd.f32 0.0, %v1003
    %1005 = vmatmul.f32.gmra.mxu0 %v922
    %v1006 = vpop.f32.mrf.mxu0
    %v1007 = vadd.f32 0.0, %v1006
    %1008 = vmatmul.f32.gmra.mxu0 %v921
    %v1009 = vpop.f32.mrf.mxu0
    %v1010 = vadd.f32 0.0, %v1009
    %1011 = vdwg.mxu0
    %1012 = vmatpush.msra.mxu0 0.0
    %1013 = vmatpush.msra.mxu0 0.0
    %1014 = vmatpush.msra.mxu0 %v913
    %1015 = vmatpush.msra.mxu0 %v911
    %1016 = vmatpush.msra.mxu0 %v909
    %1017 = vmatpush.msra.mxu0 %v907
    %1018 = vmatpush.msra.mxu0 %v905
    %1019 = vmatpush.msra.mxu0 %v903
    %1020 = vmatpush.msra.mxu0 %v901
    %1021 = vmatpush.msra.mxu0 %v899
    %1022 = vmatpush.msra.mxu0 %v897
    %1023 = vmatpush.msra.mxu0 %v895
    %1024 = vmatpush.msra.mxu0 %v893
    %1025 = vmatpush.msra.mxu0 %v891
    %1026 = vmatpush.msra.mxu0 %v889
    %1027 = vmatpush.msra.mxu0 %v887
    %1028 = vmatmul.f32.gmra.mxu0 %v928
    %v1029 = vpop.f32.mrf.mxu0
    %v1030 = vadd.f32 %v1004, %v1029
    %1031 = vmatmul.f32.gmra.mxu0 %v930
    %v1032 = vpop.f32.mrf.mxu0
    %v1033 = vadd.f32 %v1007, %v1032
    %1034 = vmatmul.f32.gmra.mxu0 %v932
    %v1035 = vpop.f32.mrf.mxu0
    %v1036 = vadd.f32 %v1010, %v1035
    %1037 = vdwg.mxu0
    %v1038 = vadd.f32 %v793, %v978
    %v1039 = vadd.f32 %v845, %v1030
    %v1040 = vadd.f32 %v796, %v981
    %v1041 = vadd.f32 %v848, %v1033
    %v1042 = vadd.f32 %v799, %v984
    %v1043 = vadd.f32 %v851, %v1036
    %v1044 = vld [vmem:[%s5] sm:$0x3]
    %v1046 = vperm.slane %v1044, 0
    %v1047 = vperm.slane %v1044, 1
    %v1050 = vadd.f32 %v1038, %v1046
    %v1051 = vadd.f32 %v1039, %v1047
    %v1052 = vadd.f32 %v1040, %v1046
    %v1053 = vadd.f32 %v1041, %v1047
    %v1054 = vadd.f32 %v1042, %v1046
    %v1055 = vadd.f32 %v1043, %v1047
    %v1056 = vmax.f32 %v1050, 0.0
    %v1057 = vmax.f32 %v1051, 0.0
    %v1058 = vmax.f32 %v1052, 0.0
    %v1059 = vmax.f32 %v1053, 0.0
    %v1060 = vmax.f32 %v1054, 0.0
    %v1061 = vmax.f32 %v1055, 0.0
    %1068 = vrot.lane.b32.xlu0 %v1056, 96
    %v1069 = vpop.permute.xlu0 %1068
    %1070 = vrot.lane.b32.xlu0 %v1057, 96
    %v1071 = vpop.permute.xlu0 %1070
    %1072 = vrot.lane.b32.xlu0 %v1058, 96
    %v1073 = vpop.permute.xlu0 %1072
    %1074 = vrot.lane.b32.xlu0 %v1059, 96
    %v1075 = vpop.permute.xlu0 %1074
    %1076 = vrot.lane.b32.xlu0 %v1060, 96
    %v1077 = vpop.permute.xlu0 %1076
    %1078 = vrot.lane.b32.xlu0 %v1061, 96
    %v1079 = vpop.permute.xlu0 %1078
    %vm1080 = vcmask 785408
    %v1081 = vsel %vm1080, %v1069, %v1071
    %v1082 = vsel %vm1080, %v1073, %v1075
    %v1083 = vsel %vm1080, %v1077, %v1079
    %v1090 = vmax.f32 %v1056, %v1081
    %v1091 = vmax.f32 %v1057, %v1071
    %v1092 = vmax.f32 %v1058, %v1082
    %v1093 = vmax.f32 %v1059, %v1075
    %v1094 = vmax.f32 %v1060, %v1083
    %v1095 = vmax.f32 %v1061, %v1079
    %v1102 = vrot.slane %v1090, 1
    %v1103 = vrot.slane %v1092, 1
    %v1104 = vsel %vm391, %v1102, %v1103
    %v1105 = vrot.slane %v1091, 1
    %v1106 = vrot.slane %v1093, 1
    %v1107 = vsel %vm391, %v1105, %v1106
    %v1108 = vrot.slane %v1094, 1
    %v1109 = vsel %vm391, %v1103, %v1108
    %v1110 = vrot.slane %v1095, 1
    %v1111 = vsel %vm391, %v1106, %v1110
    %v1118 = vmax.f32 %v1090, %v1104
    %v1119 = vmax.f32 %v1091, %v1107
    %v1120 = vmax.f32 %v1092, %v1109
    %v1121 = vmax.f32 %v1093, %v1111
    %v1122 = vmax.f32 %v1094, %v1108
    %v1123 = vmax.f32 %v1095, %v1110
    %v1124 = vld [vmem:[%s6] sm:$0xff]
    %v1125 = vld [vmem:[%s6 + $0x8] sm:$0xf]
    %vm1126 = vcmask 138240
    %v1128 = vsel %vm1126, %v1124, 0
    %v1131 = vsel %vm1126, %v1125, 0
    %vm1133 = vcmask 1040384
    %v1135 = vsel %vm1133, %v1122, 0
    %v1138 = vsel %vm1133, %v1123, 0
    %1140 = vmatpush.msra.mxu0 0.0
    %1141 = vmatpush.msra.mxu0 0.0
    %1142 = vmatpush.msra.mxu0 0.0
    %1143 = vmatpush.msra.mxu0 0.0
    %1144 = vmatpush.msra.mxu0 0.0
    %1145 = vmatpush.msra.mxu0 0.0
    %1146 = vmatpush.msra.mxu0 0.0
    %1147 = vmatpush.msra.mxu0 0.0
    %1148 = vmatpush.msra.mxu0 0.0
    %1149 = vmatpush.msra.mxu0 0.0
    %1150 = vmatpush.msra.mxu0 0.0
    %1151 = vmatpush.msra.mxu0 0.0
    %1152 = vmatpush.msra.mxu0 0.0
    %1153 = vmatpush.msra.mxu0 %v1135
    %1154 = vmatpush.msra.mxu0 %v1120
    %1155 = vmatpush.msra.mxu0 %v1118
    %1156 = vmatmul.f32.gmra.mxu0 %v1128
    %v1157 = vpop.f32.mrf.mxu0
    %v1158 = vadd.f32 0.0, %v1157
    %1159 = vmatmul.f32.gmra.mxu0 %v1131
    %v1160 = vpop.f32.mrf.mxu0
    %v1161 = vadd.f32 0.0, %v1160
    %1162 = vdwg.mxu0
    %1163 = vmatpush.msra.mxu0 0.0
    %1164 = vmatpush.msra.mxu0 0.0
    %1165 = vmatpush.msra.mxu0 0.0
    %1166 = vmatpush.msra.mxu0 0.0
    %1167 = vmatpush.msra.mxu0 0.0
    %1168 = vmatpush.msra.mxu0 0.0
    %1169 = vmatpush.msra.mxu0 0.0
    %1170 = vmatpush.msra.mxu0 0.0
    %1171 = vmatpush.msra.mxu0 0.0
    %1172 = vmatpush.msra.mxu0 0.0
    %1173 = vmatpush.msra.mxu0 0.0
    %1174 = vmatpush.msra.mxu0 0.0
    %1175 = vmatpush.msra.mxu0 0.0
    %1176 = vmatpush.msra.mxu0 %v1138
    %1177 = vmatpush.msra.mxu0 %v1121
    %1178 = vmatpush.msra.mxu0 %v1119
    %1179 = vmatmul.f32.gmra.mxu0 %v1128
    %v1180 = vpop.f32.mrf.mxu0
    %v1181 = vadd.f32 0.0, %v1180
    %1182 = vmatmul.f32.gmra.mxu0 %v1131
    %v1183 = vpop.f32.mrf.mxu0
    %v1184 = vadd.f32 0.0, %v1183
    %1185 = vdwg.mxu0
    %v1186 = vld [vmem:[%s7] sm:$0xff]
    %v1187 = vld [vmem:[%s7 + $0x8] sm:$0xff]
    %v1188 = vld [vmem:[%s7 + $0x10] sm:$0xff]
    %v1189 = vld [vmem:[%s7 + $0x18] sm:$0xff]
    %v1190 = vld [vmem:[%s7 + $0x20] sm:$0xff]
    %v1191 = vld [vmem:[%s7 + $0x28] sm:$0xff]
    %v1192 = vld [vmem:[%s7 + $0x30] sm:$0xff]
    %v1193 = vld [vmem:[%s7 + $0x38] sm:$0xff]
    %v1194 = vld [vmem:[%s7 + $0x40] sm:$0xff]
    %v1195 = vld [vmem:[%s7 + $0x48] sm:$0xff]
    %v1196 = vld [vmem:[%s7 + $0x50] sm:$0xff]
    %v1197 = vld [vmem:[%s7 + $0x58] sm:$0xff]
    %v1198 = vld [vmem:[%s7 + $0x60] sm:$0xff]
    %v1199 = vld [vmem:[%s7 + $0x68] sm:$0xff]
    %v1200 = vld [vmem:[%s7 + $0x70] sm:$0xff]
    %v1201 = vld [vmem:[%s7 + $0x78] sm:$0xff]
    %v1202 = vld [vmem:[%s7 + $0x80] sm:$0xff]
    %v1203 = vld [vmem:[%s7 + $0x88] sm:$0xff]
    %v1204 = vld [vmem:[%s7 + $0x90] sm:$0xff]
    %v1205 = vld [vmem:[%s7 + $0x98] sm:$0xff]
    %v1206 = vld [vmem:[%s7 + $0xa0] sm:$0xff]
    %v1207 = vld [vmem:[%s7 + $0xa8] sm:$0xff]
    %v1208 = vld [vmem:[%s7 + $0xb0] sm:$0xff]
    %v1209 = vld [vmem:[%s7 + $0xb8] sm:$0xff]
    %v1210 = vld [vmem:[%s7 + $0xc0] sm:$0xff]
    %v1211 = vld [vmem:[%s7 + $0xc8] sm:$0xff]
    %v1212 = vld [vmem:[%s7 + $0xd0] sm:$0xff]
    %v1213 = vld [vmem:[%s7 + $0xd8] sm:$0xff]
    %v1214 = vld [vmem:[%s7 + $0xe0] sm:$0xff]
    %v1215 = vld [vmem:[%s7 + $0xe8] sm:$0xff]
    %v1216 = vld [vmem:[%s7 + $0xf0] sm:$0xff]
    %v1217 = vld [vmem:[%s7 + $0xf8] sm:$0xff]
    %v1218 = vld [vmem:[%s7 + $0x100] sm:$0xff]
    %v1219 = vld [vmem:[%s7 + $0x108] sm:$0xff]
    %v1220 = vld [vmem:[%s7 + $0x110] sm:$0xff]
    %v1221 = vld [vmem:[%s7 + $0x118] sm:$0xff]
    %v1222 = vld [vmem:[%s7 + $0x120] sm:$0xff]
    %v1223 = vld [vmem:[%s7 + $0x128] sm:$0xff]
    %v1224 = vld [vmem:[%s7 + $0x130] sm:$0xff]
    %v1225 = vld [vmem:[%s7 + $0x138] sm:$0xff]
    %v1226 = vld [vmem:[%s7 + $0x140] sm:$0xff]
    %v1227 = vld [vmem:[%s7 + $0x148] sm:$0xff]
    %v1228 = vld [vmem:[%s7 + $0x150] sm:$0xff]
    %v1229 = vld [vmem:[%s7 + $0x158] sm:$0xff]
    %v1230 = vld [vmem:[%s7 + $0x160] sm:$0xff]
    %v1231 = vld [vmem:[%s7 + $0x168] sm:$0xff]
    %v1232 = vld [vmem:[%s7 + $0x170] sm:$0xff]
    %v1233 = vld [vmem:[%s7 + $0x178] sm:$0xff]
    %v1234 = vld [vmem:[%s7 + $0x180] sm:$0xff]
    %v1235 = vld [vmem:[%s7 + $0x188] sm:$0xff]
    %v1236 = vld [vmem:[%s7 + $0x190] sm:$0xff]
    %v1237 = vld [vmem:[%s7 + $0x198] sm:$0xff]
    %v1238 = vld [vmem:[%s7 + $0x1a0] sm:$0xff]
    %v1239 = vld [vmem:[%s7 + $0x1a8] sm:$0xff]
    %v1240 = vld [vmem:[%s7 + $0x1b0] sm:$0xff]
    %v1241 = vld [vmem:[%s7 + $0x1b8] sm:$0xff]
    %s1242 = scalar_lea.vmem %s7, 448
    %v1243 = vld [vmem:[%s1242] sm:$0xff]
    %v1244 = vld [vmem:[%s1242 + $0x8] sm:$0xff]
    %v1245 = vld [vmem:[%s1242 + $0x10] sm:$0xff]
    %v1246 = vld [vmem:[%s1242 + $0x18] sm:$0xff]
    %v1247 = vld [vmem:[%s1242 + $0x20] sm:$0xff]
    %v1248 = vld [vmem:[%s1242 + $0x28] sm:$0xff]
    %v1249 = vld [vmem:[%s1242 + $0x30] sm:$0xff]
    %v1250 = vld [vmem:[%s1242 + $0x38] sm:$0xff]
    %v1251 = vld [vmem:[%s1242 + $0x40] sm:$0xff]
    %v1252 = vld [vmem:[%s1242 + $0x48] sm:$0xff]
    %v1253 = vld [vmem:[%s1242 + $0x50] sm:$0xff]
    %v1254 = vld [vmem:[%s1242 + $0x58] sm:$0xff]
    %v1255 = vld [vmem:[%s1242 + $0x60] sm:$0xff]
    %v1256 = vld [vmem:[%s1242 + $0x68] sm:$0xff]
    %v1257 = vld [vmem:[%s1242 + $0x70] sm:$0xff]
    %v1258 = vld [vmem:[%s1242 + $0x78] sm:$0xff]
    %v1259 = vld [vmem:[%s1242 + $0x80] sm:$0xff]
    %v1260 = vld [vmem:[%s1242 + $0x88] sm:$0xff]
    %v1261 = vld [vmem:[%s1242 + $0x90] sm:$0xff]
    %v1262 = vld [vmem:[%s1242 + $0x98] sm:$0xff]
    %v1263 = vld [vmem:[%s1242 + $0xa0] sm:$0xff]
    %v1264 = vld [vmem:[%s1242 + $0xa8] sm:$0xff]
    %v1265 = vld [vmem:[%s1242 + $0xb0] sm:$0xff]
    %v1266 = vld [vmem:[%s1242 + $0xb8] sm:$0xff]
    %v1267 = vld [vmem:[%s1242 + $0xc0] sm:$0xff]
    %v1268 = vld [vmem:[%s1242 + $0xc8] sm:$0xff]
    %v1269 = vld [vmem:[%s1242 + $0xd0] sm:$0xff]
    %v1270 = vld [vmem:[%s1242 + $0xd8] sm:$0xff]
    %v1271 = vld [vmem:[%s1242 + $0xe0] sm:$0xff]
    %v1272 = vld [vmem:[%s1242 + $0xe8] sm:$0xff]
    %v1273 = vld [vmem:[%s1242 + $0xf0] sm:$0xff]
    %v1274 = vld [vmem:[%s1242 + $0xf8] sm:$0xff]
    %v1275 = vld [vmem:[%s1242 + $0x100] sm:$0xff]
    %v1276 = vld [vmem:[%s1242 + $0x108] sm:$0xff]
    %v1277 = vld [vmem:[%s1242 + $0x110] sm:$0xff]
    %v1278 = vld [vmem:[%s1242 + $0x118] sm:$0xff]
    %v1279 = vld [vmem:[%s1242 + $0x120] sm:$0xff]
    %v1280 = vld [vmem:[%s1242 + $0x128] sm:$0xff]
    %v1281 = vld [vmem:[%s1242 + $0x130] sm:$0xff]
    %v1282 = vld [vmem:[%s1242 + $0x138] sm:$0xff]
    %v1283 = vld [vmem:[%s1242 + $0x140] sm:$0xff]
    %v1284 = vld [vmem:[%s1242 + $0x148] sm:$0xff]
    %v1285 = vld [vmem:[%s1242 + $0x150] sm:$0xff]
    %v1286 = vld [vmem:[%s1242 + $0x158] sm:$0xff]
    %v1287 = vld [vmem:[%s1242 + $0x160] sm:$0xff]
    %v1288 = vld [vmem:[%s1242 + $0x168] sm:$0xff]
    %v1289 = vld [vmem:[%s1242 + $0x170] sm:$0xff]
    %v1290 = vld [vmem:[%s1242 + $0x178] sm:$0xff]
    %v1291 = vld [vmem:[%s1242 + $0x180] sm:$0xff]
    %v1292 = vld [vmem:[%s1242 + $0x188] sm:$0xff]
    %v1293 = vld [vmem:[%s1242 + $0x190] sm:$0xff]
    %v1294 = vld [vmem:[%s1242 + $0x198] sm:$0xff]
    %v1295 = vld [vmem:[%s1242 + $0x1a0] sm:$0xff]
    %v1296 = vld [vmem:[%s1242 + $0x1a8] sm:$0xff]
    %v1297 = vld [vmem:[%s1242 + $0x1b0] sm:$0xff]
    %v1298 = vld [vmem:[%s1242 + $0x1b8] sm:$0xff]
    %v1303 = vrot.slane %v1158, 1
    %v1304 = vrot.slane %v1161, 1
    %v1305 = vsel %vm391, %v1303, %v1304
    %v1306 = vrot.slane %v1181, 1
    %v1307 = vrot.slane %v1184, 1
    %v1308 = vsel %vm391, %v1306, %v1307
    %v1311 = vsel %vm1080, %v1308, 0
    %v1313 = vsel %vm1080, %v1307, 0
    %1315 = vmatpush.msra.mxu0 %v1273
    %1316 = vmatpush.msra.mxu0 %v1271
    %1317 = vmatpush.msra.mxu0 %v1269
    %1318 = vmatpush.msra.mxu0 %v1267
    %1319 = vmatpush.msra.mxu0 %v1265
    %1320 = vmatpush.msra.mxu0 %v1263
    %1321 = vmatpush.msra.mxu0 %v1261
    %1322 = vmatpush.msra.mxu0 %v1259
    %1323 = vmatpush.msra.mxu0 %v1257
    %1324 = vmatpush.msra.mxu0 %v1255
    %1325 = vmatpush.msra.mxu0 %v1253
    %1326 = vmatpush.msra.mxu0 %v1251
    %1327 = vmatpush.msra.mxu0 %v1249
    %1328 = vmatpush.msra.mxu0 %v1247
    %1329 = vmatpush.msra.mxu0 %v1245
    %1330 = vmatpush.msra.mxu0 %v1243
    %1331 = vmatmul.f32.gmra.mxu0 %v1305
    %v1332 = vpop.f32.mrf.mxu0
    %v1333 = vadd.f32 0.0, %v1332
    %1334 = vmatmul.f32.gmra.mxu0 %v1304
    %v1335 = vpop.f32.mrf.mxu0
    %v1336 = vadd.f32 0.0, %v1335
    %1337 = vdwg.mxu0
    %1338 = vmatpush.msra.mxu0 0.0
    %1339 = vmatpush.msra.mxu0 0.0
    %1340 = vmatpush.msra.mxu0 0.0
    %1341 = vmatpush.msra.mxu0 0.0
    %1342 = vmatpush.msra.mxu0 %v1297
    %1343 = vmatpush.msra.mxu0 %v1295
    %1344 = vmatpush.msra.mxu0 %v1293
    %1345 = vmatpush.msra.mxu0 %v1291
    %1346 = vmatpush.msra.mxu0 %v1289
    %1347 = vmatpush.msra.mxu0 %v1287
    %1348 = vmatpush.msra.mxu0 %v1285
    %1349 = vmatpush.msra.mxu0 %v1283
    %1350 = vmatpush.msra.mxu0 %v1281
    %1351 = vmatpush.msra.mxu0 %v1279
    %1352 = vmatpush.msra.mxu0 %v1277
    %1353 = vmatpush.msra.mxu0 %v1275
    %1354 = vmatmul.f32.gmra.mxu0 %v1311
    %v1355 = vpop.f32.mrf.mxu0
    %v1356 = vadd.f32 %v1333, %v1355
    %1357 = vmatmul.f32.gmra.mxu0 %v1313
    %v1358 = vpop.f32.mrf.mxu0
    %v1359 = vadd.f32 %v1336, %v1358
    %1360 = vdwg.mxu0
    %1361 = vmatpush.msra.mxu0 %v1274
    %1362 = vmatpush.msra.mxu0 %v1272
    %1363 = vmatpush.msra.mxu0 %v1270
    %1364 = vmatpush.msra.mxu0 %v1268
    %1365 = vmatpush.msra.mxu0 %v1266
    %1366 = vmatpush.msra.mxu0 %v1264
    %1367 = vmatpush.msra.mxu0 %v1262
    %1368 = vmatpush.msra.mxu0 %v1260
    %1369 = vmatpush.msra.mxu0 %v1258
    %1370 = vmatpush.msra.mxu0 %v1256
    %1371 = vmatpush.msra.mxu0 %v1254
    %1372 = vmatpush.msra.mxu0 %v1252
    %1373 = vmatpush.msra.mxu0 %v1250
    %1374 = vmatpush.msra.mxu0 %v1248
    %1375 = vmatpush.msra.mxu0 %v1246
    %1376 = vmatpush.msra.mxu0 %v1244
    %1377 = vmatmul.f32.gmra.mxu0 %v1305
    %v1378 = vpop.f32.mrf.mxu0
    %v1379 = vadd.f32 0.0, %v1378
    %1380 = vmatmul.f32.gmra.mxu0 %v1304
    %v1381 = vpop.f32.mrf.mxu0
    %v1382 = vadd.f32 0.0, %v1381
    %1383 = vdwg.mxu0
    %1384 = vmatpush.msra.mxu0 0.0
    %1385 = vmatpush.msra.mxu0 0.0
    %1386 = vmatpush.msra.mxu0 0.0
    %1387 = vmatpush.msra.mxu0 0.0
    %1388 = vmatpush.msra.mxu0 %v1298
    %1389 = vmatpush.msra.mxu0 %v1296
    %1390 = vmatpush.msra.mxu0 %v1294
    %1391 = vmatpush.msra.mxu0 %v1292
    %1392 = vmatpush.msra.mxu0 %v1290
    %1393 = vmatpush.msra.mxu0 %v1288
    %1394 = vmatpush.msra.mxu0 %v1286
    %1395 = vmatpush.msra.mxu0 %v1284
    %1396 = vmatpush.msra.mxu0 %v1282
    %1397 = vmatpush.msra.mxu0 %v1280
    %1398 = vmatpush.msra.mxu0 %v1278
    %1399 = vmatpush.msra.mxu0 %v1276
    %1400 = vmatmul.f32.gmra.mxu0 %v1311
    %v1401 = vpop.f32.mrf.mxu0
    %v1402 = vadd.f32 %v1379, %v1401
    %1403 = vmatmul.f32.gmra.mxu0 %v1313
    %v1404 = vpop.f32.mrf.mxu0
    %v1405 = vadd.f32 %v1382, %v1404
    %1406 = vdwg.mxu0
    %v1407 = vsel %vm1080, %v1181, 0
    %v1409 = vsel %vm1080, %v1184, 0
    %1411 = vmatpush.msra.mxu0 %v1216
    %1412 = vmatpush.msra.mxu0 %v1214
    %1413 = vmatpush.msra.mxu0 %v1212
    %1414 = vmatpush.msra.mxu0 %v1210
    %1415 = vmatpush.msra.mxu0 %v1208
    %1416 = vmatpush.msra.mxu0 %v1206
    %1417 = vmatpush.msra.mxu0 %v1204
    %1418 = vmatpush.msra.mxu0 %v1202
    %1419 = vmatpush.msra.mxu0 %v1200
    %1420 = vmatpush.msra.mxu0 %v1198
    %1421 = vmatpush.msra.mxu0 %v1196
    %1422 = vmatpush.msra.mxu0 %v1194
    %1423 = vmatpush.msra.mxu0 %v1192
    %1424 = vmatpush.msra.mxu0 %v1190
    %1425 = vmatpush.msra.mxu0 %v1188
    %1426 = vmatpush.msra.mxu0 %v1186
    %1427 = vmatmul.f32.gmra.mxu0 %v1158
    %v1428 = vpop.f32.mrf.mxu0
    %v1429 = vadd.f32 %v1356, %v1428
    %1430 = vmatmul.f32.gmra.mxu0 %v1161
    %v1431 = vpop.f32.mrf.mxu0
    %v1432 = vadd.f32 %v1359, %v1431
    %1433 = vdwg.mxu0
    %1434 = vmatpush.msra.mxu0 0.0
    %1435 = vmatpush.msra.mxu0 0.0
    %1436 = vmatpush.msra.mxu0 0.0
    %1437 = vmatpush.msra.mxu0 0.0
    %1438 = vmatpush.msra.mxu0 %v1240
    %1439 = vmatpush.msra.mxu0 %v1238
    %1440 = vmatpush.msra.mxu0 %v1236
    %1441 = vmatpush.msra.mxu0 %v1234
    %1442 = vmatpush.msra.mxu0 %v1232
    %1443 = vmatpush.msra.mxu0 %v1230
    %1444 = vmatpush.msra.mxu0 %v1228
    %1445 = vmatpush.msra.mxu0 %v1226
    %1446 = vmatpush.msra.mxu0 %v1224
    %1447 = vmatpush.msra.mxu0 %v1222
    %1448 = vmatpush.msra.mxu0 %v1220
    %1449 = vmatpush.msra.mxu0 %v1218
    %1450 = vmatmul.f32.gmra.mxu0 %v1407
    %v1451 = vpop.f32.mrf.mxu0
    %v1452 = vadd.f32 %v1429, %v1451
    %1453 = vmatmul.f32.gmra.mxu0 %v1409
    %v1454 = vpop.f32.mrf.mxu0
    %v1455 = vadd.f32 %v1432, %v1454
    %1456 = vdwg.mxu0
    %1457 = vmatpush.msra.mxu0 %v1217
    %1458 = vmatpush.msra.mxu0 %v1215
    %1459 = vmatpush.msra.mxu0 %v1213
    %1460 = vmatpush.msra.mxu0 %v1211
    %1461 = vmatpush.msra.mxu0 %v1209
    %1462 = vmatpush.msra.mxu0 %v1207
    %1463 = vmatpush.msra.mxu0 %v1205
    %1464 = vmatpush.msra.mxu0 %v1203
    %1465 = vmatpush.msra.mxu0 %v1201
    %1466 = vmatpush.msra.mxu0 %v1199
    %1467 = vmatpush.msra.mxu0 %v1197
    %1468 = vmatpush.msra.mxu0 %v1195
    %1469 = vmatpush.msra.mxu0 %v1193
    %1470 = vmatpush.msra.mxu0 %v1191
    %1471 = vmatpush.msra.mxu0 %v1189
    %1472 = vmatpush.msra.mxu0 %v1187
    %1473 = vmatmul.f32.gmra.mxu0 %v1158
    %v1474 = vpop.f32.mrf.mxu0
    %v1475 = vadd.f32 %v1402, %v1474
    %1476 = vmatmul.f32.gmra.mxu0 %v1161
    %v1477 = vpop.f32.mrf.mxu0
    %v1478 = vadd.f32 %v1405, %v1477
    %1479 = vdwg.mxu0
    %1480 = vmatpush.msra.mxu0 0.0
    %1481 = vmatpush.msra.mxu0 0.0
    %1482 = vmatpush.msra.mxu0 0.0
    %1483 = vmatpush.msra.mxu0 0.0
    %1484 = vmatpush.msra.mxu0 %v1241
    %1485 = vmatpush.msra.mxu0 %v1239
    %1486 = vmatpush.msra.mxu0 %v1237
    %1487 = vmatpush.msra.mxu0 %v1235
    %1488 = vmatpush.msra.mxu0 %v1233
    %1489 = vmatpush.msra.mxu0 %v1231
    %1490 = vmatpush.msra.mxu0 %v1229
    %1491 = vmatpush.msra.mxu0 %v1227
    %1492 = vmatpush.msra.mxu0 %v1225
    %1493 = vmatpush.msra.mxu0 %v1223
    %1494 = vmatpush.msra.mxu0 %v1221
    %1495 = vmatpush.msra.mxu0 %v1219
    %1496 = vmatmul.f32.gmra.mxu0 %v1407
    %v1497 = vpop.f32.mrf.mxu0
    %v1498 = vadd.f32 %v1475, %v1497
    %1499 = vmatmul.f32.gmra.mxu0 %v1409
    %v1500 = vpop.f32.mrf.mxu0
    %v1501 = vadd.f32 %v1478, %v1500
    %1502 = vdwg.mxu0
    %s1503 = scalar_lea.vmem %s7, 896
    %v1504 = vld [vmem:[%s1503] sm:$0xff]
    %v1505 = vld [vmem:[%s1503 + $0x8] sm:$0xff]
    %v1506 = vld [vmem:[%s1503 + $0x10] sm:$0xff]
    %v1507 = vld [vmem:[%s1503 + $0x18] sm:$0xff]
    %v1508 = vld [vmem:[%s1503 + $0x20] sm:$0xff]
    %v1509 = vld [vmem:[%s1503 + $0x28] sm:$0xff]
    %v1510 = vld [vmem:[%s1503 + $0x30] sm:$0xff]
    %v1511 = vld [vmem:[%s1503 + $0x38] sm:$0xff]
    %v1512 = vld [vmem:[%s1503 + $0x40] sm:$0xff]
    %v1513 = vld [vmem:[%s1503 + $0x48] sm:$0xff]
    %v1514 = vld [vmem:[%s1503 + $0x50] sm:$0xff]
    %v1515 = vld [vmem:[%s1503 + $0x58] sm:$0xff]
    %v1516 = vld [vmem:[%s1503 + $0x60] sm:$0xff]
    %v1517 = vld [vmem:[%s1503 + $0x68] sm:$0xff]
    %v1518 = vld [vmem:[%s1503 + $0x70] sm:$0xff]
    %v1519 = vld [vmem:[%s1503 + $0x78] sm:$0xff]
    %v1520 = vld [vmem:[%s1503 + $0x80] sm:$0xff]
    %v1521 = vld [vmem:[%s1503 + $0x88] sm:$0xff]
    %v1522 = vld [vmem:[%s1503 + $0x90] sm:$0xff]
    %v1523 = vld [vmem:[%s1503 + $0x98] sm:$0xff]
    %v1524 = vld [vmem:[%s1503 + $0xa0] sm:$0xff]
    %v1525 = vld [vmem:[%s1503 + $0xa8] sm:$0xff]
    %v1526 = vld [vmem:[%s1503 + $0xb0] sm:$0xff]
    %v1527 = vld [vmem:[%s1503 + $0xb8] sm:$0xff]
    %v1528 = vld [vmem:[%s1503 + $0xc0] sm:$0xff]
    %v1529 = vld [vmem:[%s1503 + $0xc8] sm:$0xff]
    %v1530 = vld [vmem:[%s1503 + $0xd0] sm:$0xff]
    %v1531 = vld [vmem:[%s1503 + $0xd8] sm:$0xff]
    %v1532 = vld [vmem:[%s1503 + $0xe0] sm:$0xff]
    %v1533 = vld [vmem:[%s1503 + $0xe8] sm:$0xff]
    %v1534 = vld [vmem:[%s1503 + $0xf0] sm:$0xff]
    %v1535 = vld [vmem:[%s1503 + $0xf8] sm:$0xff]
    %v1536 = vld [vmem:[%s1503 + $0x100] sm:$0xff]
    %v1537 = vld [vmem:[%s1503 + $0x108] sm:$0xff]
    %v1538 = vld [vmem:[%s1503 + $0x110] sm:$0xff]
    %v1539 = vld [vmem:[%s1503 + $0x118] sm:$0xff]
    %v1540 = vld [vmem:[%s1503 + $0x120] sm:$0xff]
    %v1541 = vld [vmem:[%s1503 + $0x128] sm:$0xff]
    %v1542 = vld [vmem:[%s1503 + $0x130] sm:$0xff]
    %v1543 = vld [vmem:[%s1503 + $0x138] sm:$0xff]
    %v1544 = vld [vmem:[%s1503 + $0x140] sm:$0xff]
    %v1545 = vld [vmem:[%s1503 + $0x148] sm:$0xff]
    %v1546 = vld [vmem:[%s1503 + $0x150] sm:$0xff]
    %v1547 = vld [vmem:[%s1503 + $0x158] sm:$0xff]
    %v1548 = vld [vmem:[%s1503 + $0x160] sm:$0xff]
    %v1549 = vld [vmem:[%s1503 + $0x168] sm:$0xff]
    %v1550 = vld [vmem:[%s1503 + $0x170] sm:$0xff]
    %v1551 = vld [vmem:[%s1503 + $0x178] sm:$0xff]
    %v1552 = vld [vmem:[%s1503 + $0x180] sm:$0xff]
    %v1553 = vld [vmem:[%s1503 + $0x188] sm:$0xff]
    %v1554 = vld [vmem:[%s1503 + $0x190] sm:$0xff]
    %v1555 = vld [vmem:[%s1503 + $0x198] sm:$0xff]
    %v1556 = vld [vmem:[%s1503 + $0x1a0] sm:$0xff]
    %v1557 = vld [vmem:[%s1503 + $0x1a8] sm:$0xff]
    %v1558 = vld [vmem:[%s1503 + $0x1b0] sm:$0xff]
    %v1559 = vld [vmem:[%s1503 + $0x1b8] sm:$0xff]
    %v1560 = vrot.slane %v1158, 2
    %v1561 = vrot.slane %v1161, 2
    %v1562 = vsel %vm914, %v1560, %v1561
    %v1563 = vrot.slane %v1181, 2
    %v1564 = vrot.slane %v1184, 2
    %v1565 = vsel %vm914, %v1563, %v1564
    %v1568 = vsel %vm1080, %v1565, 0
    %v1570 = vsel %vm1080, %v1564, 0
    %1572 = vmatpush.msra.mxu0 %v1534
    %1573 = vmatpush.msra.mxu0 %v1532
    %1574 = vmatpush.msra.mxu0 %v1530
    %1575 = vmatpush.msra.mxu0 %v1528
    %1576 = vmatpush.msra.mxu0 %v1526
    %1577 = vmatpush.msra.mxu0 %v1524
    %1578 = vmatpush.msra.mxu0 %v1522
    %1579 = vmatpush.msra.mxu0 %v1520
    %1580 = vmatpush.msra.mxu0 %v1518
    %1581 = vmatpush.msra.mxu0 %v1516
    %1582 = vmatpush.msra.mxu0 %v1514
    %1583 = vmatpush.msra.mxu0 %v1512
    %1584 = vmatpush.msra.mxu0 %v1510
    %1585 = vmatpush.msra.mxu0 %v1508
    %1586 = vmatpush.msra.mxu0 %v1506
    %1587 = vmatpush.msra.mxu0 %v1504
    %1588 = vmatmul.f32.gmra.mxu0 %v1562
    %v1589 = vpop.f32.mrf.mxu0
    %v1590 = vadd.f32 0.0, %v1589
    %1591 = vmatmul.f32.gmra.mxu0 %v1561
    %v1592 = vpop.f32.mrf.mxu0
    %v1593 = vadd.f32 0.0, %v1592
    %1594 = vdwg.mxu0
    %1595 = vmatpush.msra.mxu0 0.0
    %1596 = vmatpush.msra.mxu0 0.0
    %1597 = vmatpush.msra.mxu0 0.0
    %1598 = vmatpush.msra.mxu0 0.0
    %1599 = vmatpush.msra.mxu0 %v1558
    %1600 = vmatpush.msra.mxu0 %v1556
    %1601 = vmatpush.msra.mxu0 %v1554
    %1602 = vmatpush.msra.mxu0 %v1552
    %1603 = vmatpush.msra.mxu0 %v1550
    %1604 = vmatpush.msra.mxu0 %v1548
    %1605 = vmatpush.msra.mxu0 %v1546
    %1606 = vmatpush.msra.mxu0 %v1544
    %1607 = vmatpush.msra.mxu0 %v1542
    %1608 = vmatpush.msra.mxu0 %v1540
    %1609 = vmatpush.msra.mxu0 %v1538
    %1610 = vmatpush.msra.mxu0 %v1536
    %1611 = vmatmul.f32.gmra.mxu0 %v1568
    %v1612 = vpop.f32.mrf.mxu0
    %v1613 = vadd.f32 %v1590, %v1612
    %1614 = vmatmul.f32.gmra.mxu0 %v1570
    %v1615 = vpop.f32.mrf.mxu0
    %v1616 = vadd.f32 %v1593, %v1615
    %1617 = vdwg.mxu0
    %1618 = vmatpush.msra.mxu0 %v1535
    %1619 = vmatpush.msra.mxu0 %v1533
    %1620 = vmatpush.msra.mxu0 %v1531
    %1621 = vmatpush.msra.mxu0 %v1529
    %1622 = vmatpush.msra.mxu0 %v1527
    %1623 = vmatpush.msra.mxu0 %v1525
    %1624 = vmatpush.msra.mxu0 %v1523
    %1625 = vmatpush.msra.mxu0 %v1521
    %1626 = vmatpush.msra.mxu0 %v1519
    %1627 = vmatpush.msra.mxu0 %v1517
    %1628 = vmatpush.msra.mxu0 %v1515
    %1629 = vmatpush.msra.mxu0 %v1513
    %1630 = vmatpush.msra.mxu0 %v1511
    %1631 = vmatpush.msra.mxu0 %v1509
    %1632 = vmatpush.msra.mxu0 %v1507
    %1633 = vmatpush.msra.mxu0 %v1505
    %1634 = vmatmul.f32.gmra.mxu0 %v1562
    %v1635 = vpop.f32.mrf.mxu0
    %v1636 = vadd.f32 0.0, %v1635
    %1637 = vmatmul.f32.gmra.mxu0 %v1561
    %v1638 = vpop.f32.mrf.mxu0
    %v1639 = vadd.f32 0.0, %v1638
    %1640 = vdwg.mxu0
    %1641 = vmatpush.msra.mxu0 0.0
    %1642 = vmatpush.msra.mxu0 0.0
    %1643 = vmatpush.msra.mxu0 0.0
    %1644 = vmatpush.msra.mxu0 0.0
    %1645 = vmatpush.msra.mxu0 %v1559
    %1646 = vmatpush.msra.mxu0 %v1557
    %1647 = vmatpush.msra.mxu0 %v1555
    %1648 = vmatpush.msra.mxu0 %v1553
    %1649 = vmatpush.msra.mxu0 %v1551
    %1650 = vmatpush.msra.mxu0 %v1549
    %1651 = vmatpush.msra.mxu0 %v1547
    %1652 = vmatpush.msra.mxu0 %v1545
    %1653 = vmatpush.msra.mxu0 %v1543
    %1654 = vmatpush.msra.mxu0 %v1541
    %1655 = vmatpush.msra.mxu0 %v1539
    %1656 = vmatpush.msra.mxu0 %v1537
    %1657 = vmatmul.f32.gmra.mxu0 %v1568
    %v1658 = vpop.f32.mrf.mxu0
    %v1659 = vadd.f32 %v1636, %v1658
    %1660 = vmatmul.f32.gmra.mxu0 %v1570
    %v1661 = vpop.f32.mrf.mxu0
    %v1662 = vadd.f32 %v1639, %v1661
    %1663 = vdwg.mxu0
    %v1664 = vadd.f32 %v1452, %v1613
    %v1665 = vadd.f32 %v1498, %v1659
    %v1666 = vadd.f32 %v1455, %v1616
    %v1667 = vadd.f32 %v1501, %v1662
    %v1668 = vld [vmem:[%s8] sm:$0x3]
    %v1670 = vperm.slane %v1668, 0
    %v1671 = vperm.slane %v1668, 1
    %v1674 = vadd.f32 %v1664, %v1670
    %v1675 = vadd.f32 %v1665, %v1671
    %v1676 = vadd.f32 %v1666, %v1670
    %v1677 = vadd.f32 %v1667, %v1671
    %v1678 = vmax.f32 %v1674, 0.0
    %v1679 = vmax.f32 %v1675, 0.0
    %v1680 = vmax.f32 %v1676, 0.0
    %v1681 = vmax.f32 %v1677, 0.0
    %v1686 = vrot.slane %v1678, 1
    %v1687 = vrot.slane %v1680, 1
    %v1688 = vsel %vm391, %v1686, %v1687
    %v1689 = vrot.slane %v1679, 1
    %v1690 = vrot.slane %v1681, 1
    %v1691 = vsel %vm391, %v1689, %v1690
    %v1696 = vmax.f32 %v1678, %v1688
    %v1697 = vmax.f32 %v1679, %v1691
    %v1698 = vmax.f32 %v1680, %v1687
    %v1699 = vmax.f32 %v1681, %v1690
    %v1704 = vrot.slane %v1696, 1
    %v1705 = vrot.slane %v1698, 1
    %v1706 = vsel %vm391, %v1704, %v1705
    %v1707 = vrot.slane %v1697, 1
    %v1708 = vrot.slane %v1699, 1
    %v1709 = vsel %vm391, %v1707, %v1708
    %v1712 = vmax.f32 %v1696, %v1706
    %v1713 = vmax.f32 %v1697, %v1709
    %v1716 = vrot.slane %v1712, 1
    %v1717 = vrot.slane %v1713, 1
    %v1720 = vmax.f32 %v1712, %v1716
    %v1721 = vmax.f32 %v1713, %v1717
    %1724 = vrot.lane.b32.xlu0 %v1720, 64
    %v1725 = vpop.permute.xlu0 %1724
    %1726 = vrot.lane.b32.xlu0 %v1721, 64
    %v1727 = vpop.permute.xlu0 %1726
    %vm1728 = vcmask 523264
    %v1729 = vsel %vm1728, %v1725, %v1727
    %v1732 = vmax.f32 %v1720, %v1729
    %v1733 = vmax.f32 %v1721, %v1727
    %1736 = vrot.lane.b32.xlu0 %v1732, 64
    %v1737 = vpop.permute.xlu0 %1736
    %1738 = vrot.lane.b32.xlu0 %v1733, 64
    %v1739 = vpop.permute.xlu0 %1738
    %v1740 = vsel %vm1728, %v1737, %v1739
    %v1742 = vmax.f32 %v1732, %v1740
    %1744 = vrot.lane.b32.xlu0 %v1742, 64
    %v1745 = vpop.permute.xlu0 %1744
    %v1747 = vmax.f32 %v1742, %v1745
    %v1748 = vld [vmem:[%s9] sm:$0x3]
    %vm1749 = vcmask 56320
    %v1751 = vsel %vm1749, %v1748, 0
    %v1754 = vsel %vm391, %v1747, 0
    %1756 = vmatpush.msra.mxu0 0.0
    %1757 = vmatpush.msra.mxu0 0.0
    %1758 = vmatpush.msra.mxu0 0.0
    %1759 = vmatpush.msra.mxu0 0.0
    %1760 = vmatpush.msra.mxu0 0.0
    %1761 = vmatpush.msra.mxu0 0.0
    %1762 = vmatpush.msra.mxu0 0.0
    %1763 = vmatpush.msra.mxu0 0.0
    %1764 = vmatpush.msra.mxu0 0.0
    %1765 = vmatpush.msra.mxu0 0.0
    %1766 = vmatpush.msra.mxu0 0.0
    %1767 = vmatpush.msra.mxu0 0.0
    %1768 = vmatpush.msra.mxu0 0.0
    %1769 = vmatpush.msra.mxu0 0.0
    %1770 = vmatpush.msra.mxu0 0.0
    %1771 = vmatpush.msra.mxu0 %v1754
    %1772 = vmatmul.f32.gmra.mxu0 %v1751
    %v1773 = vpop.f32.mrf.mxu0
    %v1774 = vadd.f32 0.0, %v1773
    %1775 = vdwg.mxu0
    %v1776 = vld [vmem:[%s10] sm:$0xff]
    %v1777 = vld [vmem:[%s10 + $0x8] sm:$0xff]
    %v1778 = vld [vmem:[%s10 + $0x10] sm:$0xff]
    %v1779 = vld [vmem:[%s10 + $0x18] sm:$0xff]
    %v1780 = vld [vmem:[%s10 + $0x20] sm:$0xff]
    %v1781 = vld [vmem:[%s10 + $0x28] sm:$0xff]
    %v1782 = vld [vmem:[%s10 + $0x30] sm:$0xff]
    %v1783 = vld [vmem:[%s10 + $0x38] sm:$0xff]
    %v1784 = vld [vmem:[%s11] sm:$0x1]
    %v1786 = vperm.slane %v1784, 0
    %v1789 = vsel %vm1728, %v1774, 0
    %1791 = vmatpush.msra.mxu0 0.0
    %1792 = vmatpush.msra.mxu0 0.0
    %1793 = vmatpush.msra.mxu0 0.0
    %1794 = vmatpush.msra.mxu0 0.0
    %1795 = vmatpush.msra.mxu0 0.0
    %1796 = vmatpush.msra.mxu0 0.0
    %1797 = vmatpush.msra.mxu0 0.0
    %1798 = vmatpush.msra.mxu0 0.0
    %1799 = vmatpush.msra.mxu0 %v1783
    %1800 = vmatpush.msra.mxu0 %v1782
    %1801 = vmatpush.msra.mxu0 %v1781
    %1802 = vmatpush.msra.mxu0 %v1780
    %1803 = vmatpush.msra.mxu0 %v1779
    %1804 = vmatpush.msra.mxu0 %v1778
    %1805 = vmatpush.msra.mxu0 %v1777
    %1806 = vmatpush.msra.mxu0 %v1776
    %1807 = vmatmul.f32.gmra.mxu0 %v1789
    %v1808 = vpop.f32.mrf.mxu0
    %v1809 = vadd.f32 %v1786, %v1808
    %1810 = vdwg.mxu0
    %1811 = vst [vmem:[#allocation2] sm:$0x3] %v1809
    // Predicated region
    $region50: #{forward.1} parent=1 // pred_check
      _
    $region51: #{forward.1} parent=1 // pred_check_branch
      %1813 = sbr.rel (0) target = $region53
    $region52: #{forward.1} parent=1 // pred_region
      %1815 = vsyncadd [#allocation3], 0
      %s1817 = sshll.u32 [#allocation2], 4
      %s1818 = int_to_ptr.vmem [resolvable:$true] %s1817
      %s1819 = sshll.u32 %s12, 4
      %s1820 = int_to_ptr.hbm [resolvable:$true] %s1819
      %1822 = dma.vmem_to_hbm [thread:$0]  %s1818, 32, %s1820, [#allocation3]
    $region53: #{forward.1} parent=1 // pred_fallthru
      _
    // Predicated region
    $region54: #{forward.1} parent=1 // pred_check
      _
    $region55: #{forward.1} parent=1 // pred_check_branch
      %1824 = sbr.rel (0) target = $region57
    $region56: #{forward.1} parent=1 // pred_region
      %1826 = dma.done [#allocation3], 32
    $region57: #{forward.1} parent=1 // pred_fallthru
      _
    %1827 = vsyncpa [#allocation3], 1

</llo_original>
